<compile_context>
chip_gen: v7x
topology: tpu7x:2x2x1
jax: 0.10.0
libtpu: 0.0.40
codegen_flags: <defaults>
</compile_context>

<pallas_src>
from functools import partial

import jax
import jax.numpy as jnp
from jax import lax
from jax.experimental import pallas as pl
from jax.experimental.pallas import tpu as pltpu

_SQRT_2_OVER_PI = 0.7978845608028654
_INV_SQRT2 = 0.7071067811865476


# ---------------------------------------------------------------------------
# helpers usable inside the kernel
# ---------------------------------------------------------------------------
def _erf(x):
    # Abramowitz & Stegun 7.1.26 (|err| < 1.5e-7); exp/mul/add only.
    a1, a2, a3, a4, a5 = (0.254829592, -0.284496736, 1.421413741,
                          -1.453152027, 1.061405429)
    p = 0.3275911
    s = jnp.sign(x)
    ax = jnp.abs(x)
    t = 1.0 / (1.0 + p * ax)
    poly = ((((a5 * t + a4) * t + a3) * t + a2) * t + a1) * t
    return s * (1.0 - poly * jnp.exp(-ax * ax))


def _gelu(x, approx):
    if approx:
        # tanh-GELU: the transcendental goes to the (otherwise idle) EUP slot.
        return 0.5 * x * (1.0 + jnp.tanh(_SQRT_2_OVER_PI *
                                         (x + 0.044715 * (x * x * x))))
    # exact erf GELU (matches torch.nn.GELU() to ~1e-7)
    return 0.5 * x * (1.0 + _erf(x * _INV_SQRT2))


def _layernorm(x, gamma, beta, eps):
    mu = jnp.mean(x, axis=-1, keepdims=True)
    var = jnp.mean((x - mu) ** 2, axis=-1, keepdims=True)
    return (x - mu) * lax.rsqrt(var + eps) * gamma + beta


# ---------------------------------------------------------------------------
# kernel: one batch element per grid step
# ---------------------------------------------------------------------------
def block_kernel(x_ref, g1_ref, b1_ref, wqkv_ref, wo_ref, bo_ref,
                 g2_ref, b2_ref, w1_ref, fb1_ref, w2_ref, fb2_ref,
                 o_ref, *, heads_per_group, head_dim, eps, approx_gelu):
    f32, bf16 = jnp.float32, jnp.bfloat16
    x = x_ref[...].astype(f32)                      # (N, C)
    N, C = x.shape
    gw = heads_per_group * head_dim                 # lanes produced per group
    G = wqkv_ref.shape[0]                           # number of head groups

    # ------------------------- attention branch ---------------------------
    xn = _layernorm(x, g1_ref[...], b1_ref[...], eps)
    xn_b = xn.astype(bf16)

    def group_step(gi, acc):
        # fused Q|K|V projection for a whole head group:
        # (N, C) @ (C, 3*gw) -> (N, 3*gw), f32 accum on MXU, >=384 output lanes
        # at realistic head_dim (softmax scale already folded into Q columns).
        qkv_g = jnp.dot(xn_b, wqkv_ref[gi], preferred_element_type=f32)
        ctx_parts = []
        for h in range(heads_per_group):            # static, small (g*hd >= 128)
            o0 = h * head_dim
            q = qkv_g[:, o0:o0 + head_dim].astype(bf16)
            k = qkv_g[:, gw + o0:gw + o0 + head_dim].astype(bf16)
            v = qkv_g[:, 2 * gw + o0:2 * gw + o0 + head_dim].astype(bf16)
            s = lax.dot_general(q, k, (((1,), (1,)), ((), ())),
                                preferred_element_type=f32)          # (N, N)
            s = s - jnp.max(s, axis=-1, keepdims=True)
            p = jnp.exp(s)
            p = p * pl.reciprocal(jnp.sum(p, axis=-1, keepdims=True), approx=True)
            ctx_parts.append(jnp.dot(p.astype(bf16), v,
                                     preferred_element_type=f32))    # (N, hd)
        ctx_g = (ctx_parts[0] if heads_per_group == 1
                 else jnp.concatenate(ctx_parts, axis=-1))            # (N, gw)
        # wide-output projection fold: contraction gw (>=128 for real shapes),
        # output C lanes, accumulated across the G groups (no per-head folds).
        return acc + jnp.dot(ctx_g.astype(bf16), wo_ref[gi],
                             preferred_element_type=f32)

    acc0 = jnp.zeros((N, C), f32)
    if G == 1:
        attn = group_step(0, acc0)
    else:
        # rolled loop -> only one group's (N, N) score tiles live at a time.
        attn = lax.fori_loop(0, G, group_step, acc0)
    x1 = x + attn + bo_ref[...]                      # residual 1 + proj bias

    # ----------------------------- MLP branch ------------------------------
    xn2 = _layernorm(x1, g2_ref[...], b2_ref[...], eps)
    h1 = jnp.dot(xn2.astype(bf16), w1_ref[...],
                 preferred_element_type=f32) + fb1_ref[...]
    h1 = _gelu(h1, approx_gelu)
    y = jnp.dot(h1.astype(bf16), w2_ref[...],
                preferred_element_type=f32) + fb2_ref[...]

    o_ref[...] = (x1 + y).astype(o_ref.dtype)        # residual 2


# ---------------------------------------------------------------------------
# wrapper
# ---------------------------------------------------------------------------
def _pick_group_size(num_heads, head_dim, target_lanes):
    """Smallest divisor g of num_heads with g*head_dim >= target_lanes
    (falls back to all heads in one group if none reaches the target)."""
    g = num_heads
    for cand in range(1, num_heads + 1):
        if num_heads % cand == 0 and cand * head_dim >= target_lanes:
            g = cand
            break
    return g


def block_forward(x, params, *, num_heads, eps=1e-6, approx_gelu=True,
                  group_lanes=128):
    # group_lanes: target output-lane width per head group. 128 is optimal on
    # v5e (4x128^2 MXU); 256 can be swept on v6e/v7x (2x256^2 MXU) at the cost
    # of more concurrent (N,N) score tiles per group.
    B, N, C = x.shape
    assert C % num_heads == 0
    hd = C // num_heads
    scale = hd ** (-0.5)
    (g1, b1, wqkv, wproj, bproj, g2, b2, w1, fb1, w2, fb2) = params
    hidden = w1.shape[0]

    f32, bf16 = jnp.float32, jnp.bfloat16

    g = _pick_group_size(num_heads, hd, group_lanes)
    gw = g * hd
    G = num_heads // g

    # PyTorch Linear stores (out, in); we want (in, out).  Split q/k/v, fold
    # the softmax scale into Q, and pack weights group-major so the kernel's
    # projections are wide matmuls and all in-group slices are static.
    wqkv_t = wqkv.T.astype(f32)                         # (C, 3C): [q | k | v]

    def grp(w):                                         # (C, C) -> (G, C, gw)
        return jnp.transpose(w.reshape(C, G, gw), (1, 0, 2))

    wq = grp(wqkv_t[:, 0 * C:1 * C] * scale)
    wk = grp(wqkv_t[:, 1 * C:2 * C])
    wv = grp(wqkv_t[:, 2 * C:3 * C])
    wqkv_g = jnp.concatenate([wq, wk, wv], axis=-1).astype(bf16)   # (G, C, 3*gw)
    wo_g = wproj.T.astype(f32).reshape(G, gw, C).astype(bf16)      # (G, gw, C)
    w1_t = w1.T.astype(bf16)                            # (C, hidden)
    w2_t = w2.T.astype(bf16)                            # (hidden, C)

    g1_2, b1_2 = g1[None, :].astype(f32), b1[None, :].astype(f32)
    g2_2, b2_2 = g2[None, :].astype(f32), b2[None, :].astype(f32)
    bo_2 = bproj[None, :].astype(f32)
    fb1_2 = fb1[None, :].astype(f32)
    fb2_2 = fb2[None, :].astype(f32)

    weights = (g1_2, b1_2, wqkv_g, wo_g, bo_2,
               g2_2, b2_2, w1_t, fb1_2, w2_t, fb2_2)

    # whole-array VMEM residents: one copy, no per-grid-step re-DMA, no
    # double buffering of constant blocks.
    w_specs = [pl.BlockSpec(memory_space=pltpu.MemorySpace.VMEM)
               for _ in weights]

    # VMEM budget: bf16 weights + pipelined x/out blocks + live intermediates
    # (only one group's score tiles live at a time thanks to the rolled loop).
    weight_bytes = 2 * (3 * C * C + C * C + 2 * C * hidden) + 4 * (6 * C + hidden)
    est = (weight_bytes
           + 4 * N * C * 2 * 2                                   # x/out, 2-buffered
           + 4 * (g * N * N + 3 * N * gw + N * hidden + 6 * N * C))
    try:
        vmem_cap = int(pltpu.get_tpu_info().vmem_capacity_bytes)
    except Exception:
        vmem_cap = 64 << 20                                      # conservative
    headroom = max(8 << 20, vmem_cap // 8)                       # compiler scratch/DMA
    vmem_limit = int(min(max(2 * est + (4 << 20), 32 << 20), vmem_cap - headroom))

    # advisory cost for XLA scheduling around the custom call
    flops = 2 * B * (N * C * 3 * C                  # qkv projection
                     + 2 * num_heads * N * N * hd   # scores + ctx
                     + N * C * C                    # output projection
                     + 2 * N * C * hidden)          # mlp
    transcendentals = B * (num_heads * N * N + N * hidden)
    bytes_accessed = 2 * 4 * B * N * C + weight_bytes

    kern = partial(block_kernel, heads_per_group=g, head_dim=hd, eps=eps,
                   approx_gelu=approx_gelu)

    return pl.pallas_call(
        kern,
        out_shape=jax.ShapeDtypeStruct((B, N, C), x.dtype),
        grid=(B,),
        in_specs=[pl.BlockSpec((None, N, C), lambda b: (b, 0, 0))] + w_specs,
        out_specs=pl.BlockSpec((None, N, C), lambda b: (b, 0, 0)),
        compiler_params=pltpu.CompilerParams(
            dimension_semantics=("parallel",),
            vmem_limit_bytes=vmem_limit),
        cost_estimate=pl.CostEstimate(flops=int(flops),
                                      transcendentals=int(transcendentals),
                                      bytes_accessed=int(bytes_accessed)),
    )(x, *weights)


# ---------------------------------------------------------------------------
# pure-JAX reference (mirrors the PyTorch forward exactly, f32 + exact GELU)
# ---------------------------------------------------------------------------
def block_reference(x, params, *, num_heads, eps=1e-6):
    (g1, b1, wqkv, wproj, bproj, g2, b2, w1, fb1, w2, fb2) = params
    B, N, C = x.shape
    hd = C // num_heads
    scale = hd ** (-0.5)

    def ln(v, g, b):
        mu = jnp.mean(v, -1, keepdims=True)
        var = jnp.mean((v - mu) ** 2, -1, keepdims=True)
        return (v - mu) / jnp.sqrt(var + eps) * g + b

    xn = ln(x, g1, b1)
    qkv = xn @ wqkv.T                                        # (B, N, 3C)
    qkv = qkv.reshape(B, N, 3, num_heads, hd).transpose(2, 0, 3, 1, 4)
    q, k, v = qkv[0], qkv[1], qkv[2]                         # (B, H, N, hd)
    attn = (q @ jnp.swapaxes(k, -2, -1)) * scale
    attn = jax.nn.softmax(attn, axis=-1)
    ctx = (attn @ v).transpose(0, 2, 1, 3).reshape(B, N, C)
    x = x + (ctx @ wproj.T + bproj)

    xn2 = ln(x, g2, b2)
    h = jax.nn.gelu(xn2 @ w1.T + fb1, approximate=False)
    return x + (h @ w2.T + fb2)


# ---------------------------------------------------------------------------
if __name__ == "__main__":
    B, N, C = 2, 8, 32
    num_heads = 4
    mlp_ratio = 4.0
    hidden = int(C * mlp_ratio)

    key = jax.random.PRNGKey(0)
    ks = jax.random.split(key, 8)

    x = jax.random.normal(ks[0], (B, N, C), dtype=jnp.float32)

    # deterministic synthetic parameters (module shapes; qkv_bias=False)
    params = (
        jnp.ones((C,), jnp.float32),                                    # norm1.weight
        jnp.zeros((C,), jnp.float32),                                   # norm1.bias
        jax.random.normal(ks[1], (3 * C, C), jnp.float32) * 0.02,       # qkv.weight
        jax.random.normal(ks[2], (C, C), jnp.float32) * 0.02,           # proj.weight
        jax.random.normal(ks[3], (C,), jnp.float32) * 0.02,             # proj.bias
        jnp.ones((C,), jnp.float32),                                    # norm2.weight
        jnp.zeros((C,), jnp.float32),                                   # norm2.bias
        jax.random.normal(ks[4], (hidden, C), jnp.float32) * 0.02,      # fc1.weight
        jax.random.normal(ks[5], (hidden,), jnp.float32) * 0.02,        # fc1.bias
        jax.random.normal(ks[6], (C, hidden), jnp.float32) * 0.02,      # fc2.weight
        jax.random.normal(ks[7], (C,), jnp.float32) * 0.02,             # fc2.bias
    )

    ref = block_reference(x, params, num_heads=num_heads)

    # default grouping: all heads land in a single group at these tiny dims
    # (exercises the G == 1 inline path)
    out1 = jax.block_until_ready(block_forward(x, params, num_heads=num_heads))
    # forced narrow groups: exercises the multi-group rolled fori_loop path
    out2 = jax.block_until_ready(
        block_forward(x, params, num_heads=num_heads, group_lanes=16))

    for out in (out1, out2):
        assert out.shape == (B, N, C)
        # bf16 MXU operands + tanh-GELU + approx reciprocal -> relaxed tolerance
        err = float(jnp.max(jnp.abs(out - ref)))
        assert err < 2e-2, f"max abs err {err}"
    print("KERNEL_OK")
</pallas_src>

<mosaic_0001>
module attributes {stable_mosaic.version = 11 : i64} {
  func.func @block_kernel(%arg0: i32, %arg1: memref<1x8x32xf32, #tpu.memory_space<vmem>>, %arg2: memref<1x32xf32, #tpu.memory_space<vmem>>, %arg3: memref<1x32xf32, #tpu.memory_space<vmem>>, %arg4: memref<1x32x96xbf16, #tpu.memory_space<vmem>>, %arg5: memref<1x32x32xbf16, #tpu.memory_space<vmem>>, %arg6: memref<1x32xf32, #tpu.memory_space<vmem>>, %arg7: memref<1x32xf32, #tpu.memory_space<vmem>>, %arg8: memref<1x32xf32, #tpu.memory_space<vmem>>, %arg9: memref<32x128xbf16, #tpu.memory_space<vmem>>, %arg10: memref<1x128xf32, #tpu.memory_space<vmem>>, %arg11: memref<128x32xbf16, #tpu.memory_space<vmem>>, %arg12: memref<1x32xf32, #tpu.memory_space<vmem>>, %arg13: memref<1x8x32xf32, #tpu.memory_space<vmem>>) attributes {dimension_semantics = [#tpu.dimension_semantics<parallel>], iteration_bounds = array<i64: 2>, scalar_prefetch = 0 : i64, scratch_operands = 0 : i64, tpu.core_type = #tpu.core_type<tc>, window_params = [{transform_indices = @transform_0, window_bounds = array<i64: 1, 8, 32>}, {pipeline_mode = #tpu.pipeline_mode<synchronous>, transform_indices = @transform_1, window_bounds = array<i64: 1, 32>}, {pipeline_mode = #tpu.pipeline_mode<synchronous>, transform_indices = @transform_2, window_bounds = array<i64: 1, 32>}, {pipeline_mode = #tpu.pipeline_mode<synchronous>, transform_indices = @transform_3, window_bounds = array<i64: 1, 32, 96>}, {pipeline_mode = #tpu.pipeline_mode<synchronous>, transform_indices = @transform_4, window_bounds = array<i64: 1, 32, 32>}, {pipeline_mode = #tpu.pipeline_mode<synchronous>, transform_indices = @transform_5, window_bounds = array<i64: 1, 32>}, {pipeline_mode = #tpu.pipeline_mode<synchronous>, transform_indices = @transform_6, window_bounds = array<i64: 1, 32>}, {pipeline_mode = #tpu.pipeline_mode<synchronous>, transform_indices = @transform_7, window_bounds = array<i64: 1, 32>}, {pipeline_mode = #tpu.pipeline_mode<synchronous>, transform_indices = @transform_8, window_bounds = array<i64: 32, 128>}, {pipeline_mode = #tpu.pipeline_mode<synchronous>, transform_indices = @transform_9, window_bounds = array<i64: 1, 128>}, {pipeline_mode = #tpu.pipeline_mode<synchronous>, transform_indices = @transform_10, window_bounds = array<i64: 128, 32>}, {pipeline_mode = #tpu.pipeline_mode<synchronous>, transform_indices = @transform_11, window_bounds = array<i64: 1, 32>}, {transform_indices = @transform_12, window_bounds = array<i64: 1, 8, 32>}]} {
    %c0 = arith.constant 0 : index
    %c0_0 = arith.constant 0 : index
    %c0_1 = arith.constant 0 : index
    %0 = vector.load %arg1[%c0, %c0_0, %c0_1] : memref<1x8x32xf32, #tpu.memory_space<vmem>>, vector<1x8x32xf32>
    %1 = vector.shape_cast %0 : vector<1x8x32xf32> to vector<8x32xf32>
    %c0_2 = arith.constant 0 : index
    %c0_3 = arith.constant 0 : index
    %2 = vector.load %arg2[%c0_2, %c0_3] : memref<1x32xf32, #tpu.memory_space<vmem>>, vector<1x32xf32>
    %c0_4 = arith.constant 0 : index
    %c0_5 = arith.constant 0 : index
    %3 = vector.load %arg3[%c0_4, %c0_5] : memref<1x32xf32, #tpu.memory_space<vmem>>, vector<1x32xf32>
    %cst = arith.constant dense<0.000000e+00> : vector<8xf32>
    %4 = vector.multi_reduction <add>, %1, %cst [1] : vector<8x32xf32> to vector<8xf32>
    %5 = vector.shape_cast %4 : vector<8xf32> to vector<8x1xf32>
    %cst_6 = arith.constant 3.200000e+01 : f32
    %6 = vector.broadcast %cst_6 : f32 to vector<8x1xf32>
    %7 = arith.divf %5, %6 : vector<8x1xf32>
    %8 = vector.broadcast %7 : vector<8x1xf32> to vector<8x32xf32>
    %9 = arith.subf %1, %8 : vector<8x32xf32>
    %10 = arith.mulf %9, %9 : vector<8x32xf32>
    %cst_7 = arith.constant dense<0.000000e+00> : vector<8xf32>
    %11 = vector.multi_reduction <add>, %10, %cst_7 [1] : vector<8x32xf32> to vector<8xf32>
    %12 = vector.shape_cast %11 : vector<8xf32> to vector<8x1xf32>
    %cst_8 = arith.constant 3.200000e+01 : f32
    %13 = vector.broadcast %cst_8 : f32 to vector<8x1xf32>
    %14 = arith.divf %12, %13 : vector<8x1xf32>
    %15 = vector.broadcast %7 : vector<8x1xf32> to vector<8x32xf32>
    %16 = arith.subf %1, %15 : vector<8x32xf32>
    %cst_9 = arith.constant 9.99999997E-7 : f32
    %17 = vector.broadcast %cst_9 : f32 to vector<8x1xf32>
    %18 = arith.addf %14, %17 : vector<8x1xf32>
    %19 = math.rsqrt %18 : vector<8x1xf32>
    %20 = vector.broadcast %19 : vector<8x1xf32> to vector<8x32xf32>
    %21 = arith.mulf %16, %20 : vector<8x32xf32>
    %22 = vector.broadcast %2 : vector<1x32xf32> to vector<8x32xf32>
    %23 = arith.mulf %21, %22 : vector<8x32xf32>
    %24 = vector.broadcast %3 : vector<1x32xf32> to vector<8x32xf32>
    %25 = arith.addf %23, %24 : vector<8x32xf32>
    %26 = arith.truncf %25 : vector<8x32xf32> to vector<8x32xbf16>
    %cst_10 = arith.constant 0.000000e+00 : f32
    %27 = vector.broadcast %cst_10 : f32 to vector<8x32xf32>
    %c0_11 = arith.constant 0 : index
    %c0_12 = arith.constant 0 : index
    %c0_13 = arith.constant 0 : index
    %28 = vector.load %arg4[%c0_11, %c0_12, %c0_13] : memref<1x32x96xbf16, #tpu.memory_space<vmem>>, vector<1x32x96xbf16>
    %29 = vector.shape_cast %28 : vector<1x32x96xbf16> to vector<32x96xbf16>
    %cst_14 = arith.constant dense<0.000000e+00> : vector<8x96xf32>
    %30 = tpu.matmul %26, %29, %cst_14 {dimension_numbers = #tpu.dot_dimension_numbers<[1], [0], [0], [1], [0, 0, 1, 1], [], []>} : vector<8x32xbf16>, vector<32x96xbf16>, vector<8x96xf32> -> vector<8x96xf32>
    %31 = vector.extract_strided_slice %30 {offsets = [0, 0], sizes = [8, 8], strides = [1, 1]} : vector<8x96xf32> to vector<8x8xf32>
    %32 = arith.truncf %31 : vector<8x8xf32> to vector<8x8xbf16>
    %33 = vector.extract_strided_slice %30 {offsets = [0, 32], sizes = [8, 8], strides = [1, 1]} : vector<8x96xf32> to vector<8x8xf32>
    %34 = arith.truncf %33 : vector<8x8xf32> to vector<8x8xbf16>
    %35 = vector.extract_strided_slice %30 {offsets = [0, 64], sizes = [8, 8], strides = [1, 1]} : vector<8x96xf32> to vector<8x8xf32>
    %36 = arith.truncf %35 : vector<8x8xf32> to vector<8x8xbf16>
    %cst_15 = arith.constant dense<0.000000e+00> : vector<8x8xf32>
    %37 = tpu.matmul %32, %34, %cst_15 {dimension_numbers = #tpu.dot_dimension_numbers<[1], [1], [0], [0], [0, 0, 1, 0], [], []>} : vector<8x8xbf16>, vector<8x8xbf16>, vector<8x8xf32> -> vector<8x8xf32>
    %cst_16 = arith.constant dense<0xFF800000> : vector<8xf32>
    %38 = vector.multi_reduction <maximumf>, %37, %cst_16 [1] : vector<8x8xf32> to vector<8xf32>
    %39 = vector.shape_cast %38 : vector<8xf32> to vector<8x1xf32>
    %40 = vector.broadcast %39 : vector<8x1xf32> to vector<8x8xf32>
    %41 = arith.subf %37, %40 : vector<8x8xf32>
    %42 = math.exp %41 : vector<8x8xf32>
    %cst_17 = arith.constant dense<0.000000e+00> : vector<8xf32>
    %43 = vector.multi_reduction <add>, %42, %cst_17 [1] : vector<8x8xf32> to vector<8xf32>
    %44 = vector.shape_cast %43 : vector<8xf32> to vector<8x1xf32>
    %45 = tpu.reciprocal %44 {approx = true} : vector<8x1xf32> -> vector<8x1xf32>
    %46 = vector.broadcast %45 : vector<8x1xf32> to vector<8x8xf32>
    %47 = arith.mulf %42, %46 : vector<8x8xf32>
    %48 = arith.truncf %47 : vector<8x8xf32> to vector<8x8xbf16>
    %cst_18 = arith.constant dense<0.000000e+00> : vector<8x8xf32>
    %49 = tpu.matmul %48, %36, %cst_18 {dimension_numbers = #tpu.dot_dimension_numbers<[1], [0], [0], [1], [0, 0, 1, 1], [], []>} : vector<8x8xbf16>, vector<8x8xbf16>, vector<8x8xf32> -> vector<8x8xf32>
    %50 = vector.extract_strided_slice %30 {offsets = [0, 8], sizes = [8, 8], strides = [1, 1]} : vector<8x96xf32> to vector<8x8xf32>
    %51 = arith.truncf %50 : vector<8x8xf32> to vector<8x8xbf16>
    %52 = vector.extract_strided_slice %30 {offsets = [0, 40], sizes = [8, 8], strides = [1, 1]} : vector<8x96xf32> to vector<8x8xf32>
    %53 = arith.truncf %52 : vector<8x8xf32> to vector<8x8xbf16>
    %54 = vector.extract_strided_slice %30 {offsets = [0, 72], sizes = [8, 8], strides = [1, 1]} : vector<8x96xf32> to vector<8x8xf32>
    %55 = arith.truncf %54 : vector<8x8xf32> to vector<8x8xbf16>
    %cst_19 = arith.constant dense<0.000000e+00> : vector<8x8xf32>
    %56 = tpu.matmul %51, %53, %cst_19 {dimension_numbers = #tpu.dot_dimension_numbers<[1], [1], [0], [0], [0, 0, 1, 0], [], []>} : vector<8x8xbf16>, vector<8x8xbf16>, vector<8x8xf32> -> vector<8x8xf32>
    %cst_20 = arith.constant dense<0xFF800000> : vector<8xf32>
    %57 = vector.multi_reduction <maximumf>, %56, %cst_20 [1] : vector<8x8xf32> to vector<8xf32>
    %58 = vector.shape_cast %57 : vector<8xf32> to vector<8x1xf32>
    %59 = vector.broadcast %58 : vector<8x1xf32> to vector<8x8xf32>
    %60 = arith.subf %56, %59 : vector<8x8xf32>
    %61 = math.exp %60 : vector<8x8xf32>
    %cst_21 = arith.constant dense<0.000000e+00> : vector<8xf32>
    %62 = vector.multi_reduction <add>, %61, %cst_21 [1] : vector<8x8xf32> to vector<8xf32>
    %63 = vector.shape_cast %62 : vector<8xf32> to vector<8x1xf32>
    %64 = tpu.reciprocal %63 {approx = true} : vector<8x1xf32> -> vector<8x1xf32>
    %65 = vector.broadcast %64 : vector<8x1xf32> to vector<8x8xf32>
    %66 = arith.mulf %61, %65 : vector<8x8xf32>
    %67 = arith.truncf %66 : vector<8x8xf32> to vector<8x8xbf16>
    %cst_22 = arith.constant dense<0.000000e+00> : vector<8x8xf32>
    %68 = tpu.matmul %67, %55, %cst_22 {dimension_numbers = #tpu.dot_dimension_numbers<[1], [0], [0], [1], [0, 0, 1, 1], [], []>} : vector<8x8xbf16>, vector<8x8xbf16>, vector<8x8xf32> -> vector<8x8xf32>
    %69 = vector.extract_strided_slice %30 {offsets = [0, 16], sizes = [8, 8], strides = [1, 1]} : vector<8x96xf32> to vector<8x8xf32>
    %70 = arith.truncf %69 : vector<8x8xf32> to vector<8x8xbf16>
    %71 = vector.extract_strided_slice %30 {offsets = [0, 48], sizes = [8, 8], strides = [1, 1]} : vector<8x96xf32> to vector<8x8xf32>
    %72 = arith.truncf %71 : vector<8x8xf32> to vector<8x8xbf16>
    %73 = vector.extract_strided_slice %30 {offsets = [0, 80], sizes = [8, 8], strides = [1, 1]} : vector<8x96xf32> to vector<8x8xf32>
    %74 = arith.truncf %73 : vector<8x8xf32> to vector<8x8xbf16>
    %cst_23 = arith.constant dense<0.000000e+00> : vector<8x8xf32>
    %75 = tpu.matmul %70, %72, %cst_23 {dimension_numbers = #tpu.dot_dimension_numbers<[1], [1], [0], [0], [0, 0, 1, 0], [], []>} : vector<8x8xbf16>, vector<8x8xbf16>, vector<8x8xf32> -> vector<8x8xf32>
    %cst_24 = arith.constant dense<0xFF800000> : vector<8xf32>
    %76 = vector.multi_reduction <maximumf>, %75, %cst_24 [1] : vector<8x8xf32> to vector<8xf32>
    %77 = vector.shape_cast %76 : vector<8xf32> to vector<8x1xf32>
    %78 = vector.broadcast %77 : vector<8x1xf32> to vector<8x8xf32>
    %79 = arith.subf %75, %78 : vector<8x8xf32>
    %80 = math.exp %79 : vector<8x8xf32>
    %cst_25 = arith.constant dense<0.000000e+00> : vector<8xf32>
    %81 = vector.multi_reduction <add>, %80, %cst_25 [1] : vector<8x8xf32> to vector<8xf32>
    %82 = vector.shape_cast %81 : vector<8xf32> to vector<8x1xf32>
    %83 = tpu.reciprocal %82 {approx = true} : vector<8x1xf32> -> vector<8x1xf32>
    %84 = vector.broadcast %83 : vector<8x1xf32> to vector<8x8xf32>
    %85 = arith.mulf %80, %84 : vector<8x8xf32>
    %86 = arith.truncf %85 : vector<8x8xf32> to vector<8x8xbf16>
    %cst_26 = arith.constant dense<0.000000e+00> : vector<8x8xf32>
    %87 = tpu.matmul %86, %74, %cst_26 {dimension_numbers = #tpu.dot_dimension_numbers<[1], [0], [0], [1], [0, 0, 1, 1], [], []>} : vector<8x8xbf16>, vector<8x8xbf16>, vector<8x8xf32> -> vector<8x8xf32>
    %88 = vector.extract_strided_slice %30 {offsets = [0, 24], sizes = [8, 8], strides = [1, 1]} : vector<8x96xf32> to vector<8x8xf32>
    %89 = arith.truncf %88 : vector<8x8xf32> to vector<8x8xbf16>
    %90 = vector.extract_strided_slice %30 {offsets = [0, 56], sizes = [8, 8], strides = [1, 1]} : vector<8x96xf32> to vector<8x8xf32>
    %91 = arith.truncf %90 : vector<8x8xf32> to vector<8x8xbf16>
    %92 = vector.extract_strided_slice %30 {offsets = [0, 88], sizes = [8, 8], strides = [1, 1]} : vector<8x96xf32> to vector<8x8xf32>
    %93 = arith.truncf %92 : vector<8x8xf32> to vector<8x8xbf16>
    %cst_27 = arith.constant dense<0.000000e+00> : vector<8x8xf32>
    %94 = tpu.matmul %89, %91, %cst_27 {dimension_numbers = #tpu.dot_dimension_numbers<[1], [1], [0], [0], [0, 0, 1, 0], [], []>} : vector<8x8xbf16>, vector<8x8xbf16>, vector<8x8xf32> -> vector<8x8xf32>
    %cst_28 = arith.constant dense<0xFF800000> : vector<8xf32>
    %95 = vector.multi_reduction <maximumf>, %94, %cst_28 [1] : vector<8x8xf32> to vector<8xf32>
    %96 = vector.shape_cast %95 : vector<8xf32> to vector<8x1xf32>
    %97 = vector.broadcast %96 : vector<8x1xf32> to vector<8x8xf32>
    %98 = arith.subf %94, %97 : vector<8x8xf32>
    %99 = math.exp %98 : vector<8x8xf32>
    %cst_29 = arith.constant dense<0.000000e+00> : vector<8xf32>
    %100 = vector.multi_reduction <add>, %99, %cst_29 [1] : vector<8x8xf32> to vector<8xf32>
    %101 = vector.shape_cast %100 : vector<8xf32> to vector<8x1xf32>
    %102 = tpu.reciprocal %101 {approx = true} : vector<8x1xf32> -> vector<8x1xf32>
    %103 = vector.broadcast %102 : vector<8x1xf32> to vector<8x8xf32>
    %104 = arith.mulf %99, %103 : vector<8x8xf32>
    %105 = arith.truncf %104 : vector<8x8xf32> to vector<8x8xbf16>
    %cst_30 = arith.constant dense<0.000000e+00> : vector<8x8xf32>
    %106 = tpu.matmul %105, %93, %cst_30 {dimension_numbers = #tpu.dot_dimension_numbers<[1], [0], [0], [1], [0, 0, 1, 1], [], []>} : vector<8x8xbf16>, vector<8x8xbf16>, vector<8x8xf32> -> vector<8x8xf32>
    %107 = tpu.concatenate %49, %68, %87, %106 in 1 : vector<8x8xf32>, vector<8x8xf32>, vector<8x8xf32>, vector<8x8xf32> -> vector<8x32xf32>
    %108 = arith.truncf %107 : vector<8x32xf32> to vector<8x32xbf16>
    %c0_31 = arith.constant 0 : index
    %c0_32 = arith.constant 0 : index
    %c0_33 = arith.constant 0 : index
    %109 = vector.load %arg5[%c0_31, %c0_32, %c0_33] : memref<1x32x32xbf16, #tpu.memory_space<vmem>>, vector<1x32x32xbf16>
    %110 = vector.shape_cast %109 : vector<1x32x32xbf16> to vector<32x32xbf16>
    %cst_34 = arith.constant dense<0.000000e+00> : vector<8x32xf32>
    %111 = tpu.matmul %108, %110, %cst_34 {dimension_numbers = #tpu.dot_dimension_numbers<[1], [0], [0], [1], [0, 0, 1, 1], [], []>} : vector<8x32xbf16>, vector<32x32xbf16>, vector<8x32xf32> -> vector<8x32xf32>
    %112 = arith.addf %27, %111 : vector<8x32xf32>
    %113 = arith.addf %1, %112 : vector<8x32xf32>
    %c0_35 = arith.constant 0 : index
    %c0_36 = arith.constant 0 : index
    %114 = vector.load %arg6[%c0_35, %c0_36] : memref<1x32xf32, #tpu.memory_space<vmem>>, vector<1x32xf32>
    %115 = vector.broadcast %114 : vector<1x32xf32> to vector<8x32xf32>
    %116 = arith.addf %113, %115 : vector<8x32xf32>
    %c0_37 = arith.constant 0 : index
    %c0_38 = arith.constant 0 : index
    %117 = vector.load %arg7[%c0_37, %c0_38] : memref<1x32xf32, #tpu.memory_space<vmem>>, vector<1x32xf32>
    %c0_39 = arith.constant 0 : index
    %c0_40 = arith.constant 0 : index
    %118 = vector.load %arg8[%c0_39, %c0_40] : memref<1x32xf32, #tpu.memory_space<vmem>>, vector<1x32xf32>
    %cst_41 = arith.constant dense<0.000000e+00> : vector<8xf32>
    %119 = vector.multi_reduction <add>, %116, %cst_41 [1] : vector<8x32xf32> to vector<8xf32>
    %120 = vector.shape_cast %119 : vector<8xf32> to vector<8x1xf32>
    %cst_42 = arith.constant 3.200000e+01 : f32
    %121 = vector.broadcast %cst_42 : f32 to vector<8x1xf32>
    %122 = arith.divf %120, %121 : vector<8x1xf32>
    %123 = vector.broadcast %122 : vector<8x1xf32> to vector<8x32xf32>
    %124 = arith.subf %116, %123 : vector<8x32xf32>
    %125 = arith.mulf %124, %124 : vector<8x32xf32>
    %cst_43 = arith.constant dense<0.000000e+00> : vector<8xf32>
    %126 = vector.multi_reduction <add>, %125, %cst_43 [1] : vector<8x32xf32> to vector<8xf32>
    %127 = vector.shape_cast %126 : vector<8xf32> to vector<8x1xf32>
    %cst_44 = arith.constant 3.200000e+01 : f32
    %128 = vector.broadcast %cst_44 : f32 to vector<8x1xf32>
    %129 = arith.divf %127, %128 : vector<8x1xf32>
    %130 = vector.broadcast %122 : vector<8x1xf32> to vector<8x32xf32>
    %131 = arith.subf %116, %130 : vector<8x32xf32>
    %cst_45 = arith.constant 9.99999997E-7 : f32
    %132 = vector.broadcast %cst_45 : f32 to vector<8x1xf32>
    %133 = arith.addf %129, %132 : vector<8x1xf32>
    %134 = math.rsqrt %133 : vector<8x1xf32>
    %135 = vector.broadcast %134 : vector<8x1xf32> to vector<8x32xf32>
    %136 = arith.mulf %131, %135 : vector<8x32xf32>
    %137 = vector.broadcast %117 : vector<1x32xf32> to vector<8x32xf32>
    %138 = arith.mulf %136, %137 : vector<8x32xf32>
    %139 = vector.broadcast %118 : vector<1x32xf32> to vector<8x32xf32>
    %140 = arith.addf %138, %139 : vector<8x32xf32>
    %141 = arith.truncf %140 : vector<8x32xf32> to vector<8x32xbf16>
    %c0_46 = arith.constant 0 : index
    %c0_47 = arith.constant 0 : index
    %142 = vector.load %arg9[%c0_46, %c0_47] : memref<32x128xbf16, #tpu.memory_space<vmem>>, vector<32x128xbf16>
    %cst_48 = arith.constant dense<0.000000e+00> : vector<8x128xf32>
    %143 = tpu.matmul %141, %142, %cst_48 {dimension_numbers = #tpu.dot_dimension_numbers<[1], [0], [0], [1], [0, 0, 1, 1], [], []>} : vector<8x32xbf16>, vector<32x128xbf16>, vector<8x128xf32> -> vector<8x128xf32>
    %c0_49 = arith.constant 0 : index
    %c0_50 = arith.constant 0 : index
    %144 = vector.load %arg10[%c0_49, %c0_50] : memref<1x128xf32, #tpu.memory_space<vmem>>, vector<1x128xf32>
    %145 = vector.broadcast %144 : vector<1x128xf32> to vector<8x128xf32>
    %146 = arith.addf %143, %145 : vector<8x128xf32>
    %cst_51 = arith.constant 5.000000e-01 : f32
    %147 = vector.broadcast %cst_51 : f32 to vector<8x128xf32>
    %148 = arith.mulf %147, %146 : vector<8x128xf32>
    %149 = arith.mulf %146, %146 : vector<8x128xf32>
    %150 = arith.mulf %149, %146 : vector<8x128xf32>
    %cst_52 = arith.constant 4.471500e-02 : f32
    %151 = vector.broadcast %cst_52 : f32 to vector<8x128xf32>
    %152 = arith.mulf %151, %150 : vector<8x128xf32>
    %153 = arith.addf %146, %152 : vector<8x128xf32>
    %cst_53 = arith.constant 0.797884583 : f32
    %154 = vector.broadcast %cst_53 : f32 to vector<8x128xf32>
    %155 = arith.mulf %154, %153 : vector<8x128xf32>
    %156 = math.tanh %155 : vector<8x128xf32>
    %cst_54 = arith.constant 1.000000e+00 : f32
    %157 = vector.broadcast %cst_54 : f32 to vector<8x128xf32>
    %158 = arith.addf %157, %156 : vector<8x128xf32>
    %159 = arith.mulf %148, %158 : vector<8x128xf32>
    %160 = arith.truncf %159 : vector<8x128xf32> to vector<8x128xbf16>
    %c0_55 = arith.constant 0 : index
    %c0_56 = arith.constant 0 : index
    %161 = vector.load %arg11[%c0_55, %c0_56] : memref<128x32xbf16, #tpu.memory_space<vmem>>, vector<128x32xbf16>
    %cst_57 = arith.constant dense<0.000000e+00> : vector<8x32xf32>
    %162 = tpu.matmul %160, %161, %cst_57 {dimension_numbers = #tpu.dot_dimension_numbers<[1], [0], [0], [1], [0, 0, 1, 1], [], []>} : vector<8x128xbf16>, vector<128x32xbf16>, vector<8x32xf32> -> vector<8x32xf32>
    %c0_58 = arith.constant 0 : index
    %c0_59 = arith.constant 0 : index
    %163 = vector.load %arg12[%c0_58, %c0_59] : memref<1x32xf32, #tpu.memory_space<vmem>>, vector<1x32xf32>
    %164 = vector.broadcast %163 : vector<1x32xf32> to vector<8x32xf32>
    %165 = arith.addf %162, %164 : vector<8x32xf32>
    %166 = arith.addf %116, %165 : vector<8x32xf32>
    %c0_60 = arith.constant 0 : index
    %c0_61 = arith.constant 0 : index
    %c0_62 = arith.constant 0 : index
    %167 = vector.load %arg13[%c0_60, %c0_61, %c0_62] : memref<1x8x32xf32, #tpu.memory_space<vmem>>, vector<1x8x32xf32>
    %168 = vector.shape_cast %167 : vector<1x8x32xf32> to vector<8x32xf32>
    %169 = vector.shape_cast %166 : vector<8x32xf32> to vector<1x8x32xf32>
    tpu.vector_store %arg13[%c0_60, %c0_61, %c0_62], %169 {strides = array<i32>} : memref<1x8x32xf32, #tpu.memory_space<vmem>>, vector<1x8x32xf32>,
    return
  }
  func.func @transform_0(%arg0: i32) -> (i32, i32, i32) {
    %c0_i32 = arith.constant 0 : i32
    %c0_i32_0 = arith.constant 0 : i32
    %c0_i32_1 = arith.constant 0 : i32
    return %arg0, %c0_i32, %c0_i32_0 : i32, i32, i32
  }
  func.func @transform_1(%arg0: i32) -> (i32, i32) {
    %c0_i32 = arith.constant 0 : i32
    %c0_i32_0 = arith.constant 0 : i32
    %c0_i32_1 = arith.constant 0 : i32
    return %c0_i32, %c0_i32_0 : i32, i32
  }
  func.func @transform_2(%arg0: i32) -> (i32, i32) {
    %c0_i32 = arith.constant 0 : i32
    %c0_i32_0 = arith.constant 0 : i32
    %c0_i32_1 = arith.constant 0 : i32
    return %c0_i32, %c0_i32_0 : i32, i32
  }
  func.func @transform_3(%arg0: i32) -> (i32, i32, i32) {
    %c0_i32 = arith.constant 0 : i32
    %c0_i32_0 = arith.constant 0 : i32
    %c0_i32_1 = arith.constant 0 : i32
    %c0_i32_2 = arith.constant 0 : i32
    return %c0_i32, %c0_i32_0, %c0_i32_1 : i32, i32, i32
  }
  func.func @transform_4(%arg0: i32) -> (i32, i32, i32) {
    %c0_i32 = arith.constant 0 : i32
    %c0_i32_0 = arith.constant 0 : i32
    %c0_i32_1 = arith.constant 0 : i32
    %c0_i32_2 = arith.constant 0 : i32
    return %c0_i32, %c0_i32_0, %c0_i32_1 : i32, i32, i32
  }
  func.func @transform_5(%arg0: i32) -> (i32, i32) {
    %c0_i32 = arith.constant 0 : i32
    %c0_i32_0 = arith.constant 0 : i32
    %c0_i32_1 = arith.constant 0 : i32
    return %c0_i32, %c0_i32_0 : i32, i32
  }
  func.func @transform_6(%arg0: i32) -> (i32, i32) {
    %c0_i32 = arith.constant 0 : i32
    %c0_i32_0 = arith.constant 0 : i32
    %c0_i32_1 = arith.constant 0 : i32
    return %c0_i32, %c0_i32_0 : i32, i32
  }
  func.func @transform_7(%arg0: i32) -> (i32, i32) {
    %c0_i32 = arith.constant 0 : i32
    %c0_i32_0 = arith.constant 0 : i32
    %c0_i32_1 = arith.constant 0 : i32
    return %c0_i32, %c0_i32_0 : i32, i32
  }
  func.func @transform_8(%arg0: i32) -> (i32, i32) {
    %c0_i32 = arith.constant 0 : i32
    %c0_i32_0 = arith.constant 0 : i32
    %c0_i32_1 = arith.constant 0 : i32
    return %c0_i32, %c0_i32_0 : i32, i32
  }
  func.func @transform_9(%arg0: i32) -> (i32, i32) {
    %c0_i32 = arith.constant 0 : i32
    %c0_i32_0 = arith.constant 0 : i32
    %c0_i32_1 = arith.constant 0 : i32
    return %c0_i32, %c0_i32_0 : i32, i32
  }
  func.func @transform_10(%arg0: i32) -> (i32, i32) {
    %c0_i32 = arith.constant 0 : i32
    %c0_i32_0 = arith.constant 0 : i32
    %c0_i32_1 = arith.constant 0 : i32
    return %c0_i32, %c0_i32_0 : i32, i32
  }
  func.func @transform_11(%arg0: i32) -> (i32, i32) {
    %c0_i32 = arith.constant 0 : i32
    %c0_i32_0 = arith.constant 0 : i32
    %c0_i32_1 = arith.constant 0 : i32
    return %c0_i32, %c0_i32_0 : i32, i32
  }
  func.func @transform_12(%arg0: i32) -> (i32, i32, i32) {
    %c0_i32 = arith.constant 0 : i32
    %c0_i32_0 = arith.constant 0 : i32
    %c0_i32_1 = arith.constant 0 : i32
    return %arg0, %c0_i32, %c0_i32_0 : i32, i32, i32
  }
}

</mosaic_0001>

<llo_original>
// kernel: tpu_custom_call.1
$region0: #{tpu_custom_call.1}
  #allocation0 [shape = 'u32[]', space=smem, size = 0x4, offset = 0x4, fixed_abs, tag = 'smem constant byte address 0x4 - core index']
  #allocation1 [shape = 'u32[144,128]{1,0:T(1,128)}', space=vmem, size = 0x12000, scoped, tag = 'internal scratch']
  %s0 = inlined_call_operand.vmem [shape: f32[2,8,32], index: 0, kind: input, shape index: {}]
  %s1 = inlined_call_operand.vmem [shape: f32[1,32], index: 1, kind: input, shape index: {}]
  %s2 = inlined_call_operand.vmem [shape: f32[1,32], index: 2, kind: input, shape index: {}]
  %s3 = inlined_call_operand.vmem [shape: bf16[1,32,96], index: 3, kind: input, shape index: {}]
  %s4 = inlined_call_operand.vmem [shape: bf16[1,32,32], index: 4, kind: input, shape index: {}]
  %s5 = inlined_call_operand.vmem [shape: f32[1,32], index: 5, kind: input, shape index: {}]
  %s6 = inlined_call_operand.vmem [shape: f32[1,32], index: 6, kind: input, shape index: {}]
  %s7 = inlined_call_operand.vmem [shape: f32[1,32], index: 7, kind: input, shape index: {}]
  %s8 = inlined_call_operand.vmem [shape: bf16[32,128], index: 8, kind: input, shape index: {}]
  %s9 = inlined_call_operand.vmem [shape: f32[1,128], index: 9, kind: input, shape index: {}]
  %s10 = inlined_call_operand.vmem [shape: bf16[128,32], index: 10, kind: input, shape index: {}]
  %s11 = inlined_call_operand.vmem [shape: f32[1,32], index: 11, kind: input, shape index: {}]
  %s12 = inlined_call_operand.hbm [shape: f32[2,8,32], index: 12, kind: output, shape index: {}]
  %s13 = sld [smem:[#allocation0]]
  $region81: #{tpu_custom_call.1} parent=0
    _
  %s15 = ssub.s32 1, %s13
  %s16 = scalar_select 0, %s15, %s13
  $region1: #{tpu_custom_call.1} parent=0
    #allocation2 [shape = 'u8[8192]{0}', space=vmem, size = 0x2000, scoped, tag = 'output window, operand 0']
    #allocation3 [shape = 's32[2]{0}', space=sflag, size = 0x8, scoped, tag = 'scoped memory for tpu_custom_call.1']
    %17 = vsyncpa [#allocation3], 0
    %s18 = scalar_lea.sflag [#allocation3], 1
    %19 = vsyncpa %s18, 0
    loop: start=0, step=1, limit=4
    $region2: #{tpu_custom_call.1} parent=1 // loop_pre_header
      _
    $region3: #{tpu_custom_call.1} parent=1 // loop_header
      %s21 = sphi 0, %s25
      %p22 = scmp.ge.s32.totalorder %s21, 4
      %s31 = sphi 0, %s33
      %s34 = sphi 0, %s31
      %s35 = sphi 0, %s34
      %s51 = sphi 0, %s35
      %s55 = sphi 0, %s55
      %s57 = sphi 0, %s55
      %s58 = sphi 0, %s57
      %s72 = sphi 0, %s58
      %s76 = sphi 0, %s76
      %s78 = sphi 0, %s76
      %s79 = sphi 0, %s78
      %s93 = sphi 0, %s79
      %s97 = sphi 0, %s97
      %s99 = sphi 0, %s97
      %s100 = sphi 0, %s99
      %s114 = sphi 0, %s100
      %s118 = sphi 0, %s118
      %s120 = sphi 0, %s118
      %s121 = sphi 0, %s120
      %s135 = sphi 0, %s121
      %s139 = sphi 0, %s139
      %s141 = sphi 0, %s139
      %s142 = sphi 0, %s141
      %s156 = sphi 0, %s142
      %s160 = sphi 0, %s160
      %s162 = sphi 0, %s160
      %s163 = sphi 0, %s162
      %s177 = sphi 0, %s163
      %s181 = sphi 0, %s181
      %s183 = sphi 0, %s181
      %s184 = sphi 0, %s183
      %s198 = sphi 0, %s184
      %s202 = sphi 0, %s202
      %s204 = sphi 0, %s202
      %s205 = sphi 0, %s204
      %s219 = sphi 0, %s205
      %s223 = sphi 0, %s223
      %s225 = sphi 0, %s223
      %s226 = sphi 0, %s225
      %s240 = sphi 0, %s226
      %s244 = sphi 0, %s244
      %s246 = sphi 0, %s244
      %s247 = sphi 0, %s246
      %s261 = sphi 0, %s247
      %s265 = sphi 0, %s265
      %s267 = sphi 0, %s265
      %s268 = sphi 0, %s267
      %s282 = sphi 0, %s268
      %s288 = sphi 0, %s290
      %s291 = sphi 0, %s288
      %s292 = sphi 0, %s291
      %s308 = sphi 0, %s292
    $region4: #{tpu_custom_call.1} parent=1 // loop_header_branch
      %24 = sbr.rel (%p22) target = $region8
    $region5: #{tpu_custom_call.1} parent=1 // loop_body
      %s26 = ssub.s32 %s21, 1
      %s27 = ssub.s32 %s21, 2
      %s28 = sadd.s32 %s21, 1
      %s29 = ssub.s32 %s21, %s28
      %p30 = scmp.eq.s32.totalorder %s29, 0
      %s32 = sadd.s32 %s31, 1
      %s33 = scalar_select %p30, %s31, %s32
      %p36 = pneg %p30
      %p37 = scmp.eq.s32.totalorder %s21, 1
      %p38 = por %p36, %p37
      %p39 = scmp.ne.s32.totalorder %s31, %s34
      %p40 = scmp.eq.s32.totalorder %s21, 0
      %p41 = por %p39, %p40
      %p42 = scmp.ne.s32.totalorder %s31, %s34
      %p43 = scmp.eq.s32.totalorder %s26, 1
      %p44 = por %p42, %p43
      %p45 = scmp.ne.s32.totalorder %s34, %s35
      %p46 = scmp.eq.s32.totalorder %s26, 0
      %p47 = por %p45, %p46
      %p48 = scmp.ne.s32.totalorder %s34, %s35
      %p49 = scmp.eq.s32.totalorder %s27, 1
      %p50 = por %p48, %p49
      %p52 = scmp.ne.s32.totalorder %s35, %s51
      %p53 = scmp.eq.s32.totalorder %s27, 0
      %p54 = por %p52, %p53
      %s56 = sadd.s32 %s55, 1
      %p59 = scmp.eq.s32.totalorder %s21, 1
      %p60 = scmp.ne.s32.totalorder %s55, %s57
      %p61 = scmp.eq.s32.totalorder %s21, 0
      %p62 = por %p60, %p61
      %p63 = scmp.ne.s32.totalorder %s55, %s57
      %p64 = scmp.eq.s32.totalorder %s26, 1
      %p65 = por %p63, %p64
      %p66 = scmp.ne.s32.totalorder %s57, %s58
      %p67 = scmp.eq.s32.totalorder %s26, 0
      %p68 = por %p66, %p67
      %p69 = scmp.ne.s32.totalorder %s57, %s58
      %p70 = scmp.eq.s32.totalorder %s27, 1
      %p71 = por %p69, %p70
      %p73 = scmp.ne.s32.totalorder %s58, %s72
      %p74 = scmp.eq.s32.totalorder %s27, 0
      %p75 = por %p73, %p74
      %s77 = sadd.s32 %s76, 1
      %p80 = scmp.eq.s32.totalorder %s21, 1
      %p81 = scmp.ne.s32.totalorder %s76, %s78
      %p82 = scmp.eq.s32.totalorder %s21, 0
      %p83 = por %p81, %p82
      %p84 = scmp.ne.s32.totalorder %s76, %s78
      %p85 = scmp.eq.s32.totalorder %s26, 1
      %p86 = por %p84, %p85
      %p87 = scmp.ne.s32.totalorder %s78, %s79
      %p88 = scmp.eq.s32.totalorder %s26, 0
      %p89 = por %p87, %p88
      %p90 = scmp.ne.s32.totalorder %s78, %s79
      %p91 = scmp.eq.s32.totalorder %s27, 1
      %p92 = por %p90, %p91
      %p94 = scmp.ne.s32.totalorder %s79, %s93
      %p95 = scmp.eq.s32.totalorder %s27, 0
      %p96 = por %p94, %p95
      %s98 = sadd.s32 %s97, 1
      %p101 = scmp.eq.s32.totalorder %s21, 1
      %p102 = scmp.ne.s32.totalorder %s97, %s99
      %p103 = scmp.eq.s32.totalorder %s21, 0
      %p104 = por %p102, %p103
      %p105 = scmp.ne.s32.totalorder %s97, %s99
      %p106 = scmp.eq.s32.totalorder %s26, 1
      %p107 = por %p105, %p106
      %p108 = scmp.ne.s32.totalorder %s99, %s100
      %p109 = scmp.eq.s32.totalorder %s26, 0
      %p110 = por %p108, %p109
      %p111 = scmp.ne.s32.totalorder %s99, %s100
      %p112 = scmp.eq.s32.totalorder %s27, 1
      %p113 = por %p111, %p112
      %p115 = scmp.ne.s32.totalorder %s100, %s114
      %p116 = scmp.eq.s32.totalorder %s27, 0
      %p117 = por %p115, %p116
      %s119 = sadd.s32 %s118, 1
      %p122 = scmp.eq.s32.totalorder %s21, 1
      %p123 = scmp.ne.s32.totalorder %s118, %s120
      %p124 = scmp.eq.s32.totalorder %s21, 0
      %p125 = por %p123, %p124
      %p126 = scmp.ne.s32.totalorder %s118, %s120
      %p127 = scmp.eq.s32.totalorder %s26, 1
      %p128 = por %p126, %p127
      %p129 = scmp.ne.s32.totalorder %s120, %s121
      %p130 = scmp.eq.s32.totalorder %s26, 0
      %p131 = por %p129, %p130
      %p132 = scmp.ne.s32.totalorder %s120, %s121
      %p133 = scmp.eq.s32.totalorder %s27, 1
      %p134 = por %p132, %p133
      %p136 = scmp.ne.s32.totalorder %s121, %s135
      %p137 = scmp.eq.s32.totalorder %s27, 0
      %p138 = por %p136, %p137
      %s140 = sadd.s32 %s139, 1
      %p143 = scmp.eq.s32.totalorder %s21, 1
      %p144 = scmp.ne.s32.totalorder %s139, %s141
      %p145 = scmp.eq.s32.totalorder %s21, 0
      %p146 = por %p144, %p145
      %p147 = scmp.ne.s32.totalorder %s139, %s141
      %p148 = scmp.eq.s32.totalorder %s26, 1
      %p149 = por %p147, %p148
      %p150 = scmp.ne.s32.totalorder %s141, %s142
      %p151 = scmp.eq.s32.totalorder %s26, 0
      %p152 = por %p150, %p151
      %p153 = scmp.ne.s32.totalorder %s141, %s142
      %p154 = scmp.eq.s32.totalorder %s27, 1
      %p155 = por %p153, %p154
      %p157 = scmp.ne.s32.totalorder %s142, %s156
      %p158 = scmp.eq.s32.totalorder %s27, 0
      %p159 = por %p157, %p158
      %s161 = sadd.s32 %s160, 1
      %p164 = scmp.eq.s32.totalorder %s21, 1
      %p165 = scmp.ne.s32.totalorder %s160, %s162
      %p166 = scmp.eq.s32.totalorder %s21, 0
      %p167 = por %p165, %p166
      %p168 = scmp.ne.s32.totalorder %s160, %s162
      %p169 = scmp.eq.s32.totalorder %s26, 1
      %p170 = por %p168, %p169
      %p171 = scmp.ne.s32.totalorder %s162, %s163
      %p172 = scmp.eq.s32.totalorder %s26, 0
      %p173 = por %p171, %p172
      %p174 = scmp.ne.s32.totalorder %s162, %s163
      %p175 = scmp.eq.s32.totalorder %s27, 1
      %p176 = por %p174, %p175
      %p178 = scmp.ne.s32.totalorder %s163, %s177
      %p179 = scmp.eq.s32.totalorder %s27, 0
      %p180 = por %p178, %p179
      %s182 = sadd.s32 %s181, 1
      %p185 = scmp.eq.s32.totalorder %s21, 1
      %p186 = scmp.ne.s32.totalorder %s181, %s183
      %p187 = scmp.eq.s32.totalorder %s21, 0
      %p188 = por %p186, %p187
      %p189 = scmp.ne.s32.totalorder %s181, %s183
      %p190 = scmp.eq.s32.totalorder %s26, 1
      %p191 = por %p189, %p190
      %p192 = scmp.ne.s32.totalorder %s183, %s184
      %p193 = scmp.eq.s32.totalorder %s26, 0
      %p194 = por %p192, %p193
      %p195 = scmp.ne.s32.totalorder %s183, %s184
      %p196 = scmp.eq.s32.totalorder %s27, 1
      %p197 = por %p195, %p196
      %p199 = scmp.ne.s32.totalorder %s184, %s198
      %p200 = scmp.eq.s32.totalorder %s27, 0
      %p201 = por %p199, %p200
      %s203 = sadd.s32 %s202, 1
      %p206 = scmp.eq.s32.totalorder %s21, 1
      %p207 = scmp.ne.s32.totalorder %s202, %s204
      %p208 = scmp.eq.s32.totalorder %s21, 0
      %p209 = por %p207, %p208
      %p210 = scmp.ne.s32.totalorder %s202, %s204
      %p211 = scmp.eq.s32.totalorder %s26, 1
      %p212 = por %p210, %p211
      %p213 = scmp.ne.s32.totalorder %s204, %s205
      %p214 = scmp.eq.s32.totalorder %s26, 0
      %p215 = por %p213, %p214
      %p216 = scmp.ne.s32.totalorder %s204, %s205
      %p217 = scmp.eq.s32.totalorder %s27, 1
      %p218 = por %p216, %p217
      %p220 = scmp.ne.s32.totalorder %s205, %s219
      %p221 = scmp.eq.s32.totalorder %s27, 0
      %p222 = por %p220, %p221
      %s224 = sadd.s32 %s223, 1
      %p227 = scmp.eq.s32.totalorder %s21, 1
      %p228 = scmp.ne.s32.totalorder %s223, %s225
      %p229 = scmp.eq.s32.totalorder %s21, 0
      %p230 = por %p228, %p229
      %p231 = scmp.ne.s32.totalorder %s223, %s225
      %p232 = scmp.eq.s32.totalorder %s26, 1
      %p233 = por %p231, %p232
      %p234 = scmp.ne.s32.totalorder %s225, %s226
      %p235 = scmp.eq.s32.totalorder %s26, 0
      %p236 = por %p234, %p235
      %p237 = scmp.ne.s32.totalorder %s225, %s226
      %p238 = scmp.eq.s32.totalorder %s27, 1
      %p239 = por %p237, %p238
      %p241 = scmp.ne.s32.totalorder %s226, %s240
      %p242 = scmp.eq.s32.totalorder %s27, 0
      %p243 = por %p241, %p242
      %s245 = sadd.s32 %s244, 1
      %p248 = scmp.eq.s32.totalorder %s21, 1
      %p249 = scmp.ne.s32.totalorder %s244, %s246
      %p250 = scmp.eq.s32.totalorder %s21, 0
      %p251 = por %p249, %p250
      %p252 = scmp.ne.s32.totalorder %s244, %s246
      %p253 = scmp.eq.s32.totalorder %s26, 1
      %p254 = por %p252, %p253
      %p255 = scmp.ne.s32.totalorder %s246, %s247
      %p256 = scmp.eq.s32.totalorder %s26, 0
      %p257 = por %p255, %p256
      %p258 = scmp.ne.s32.totalorder %s246, %s247
      %p259 = scmp.eq.s32.totalorder %s27, 1
      %p260 = por %p258, %p259
      %p262 = scmp.ne.s32.totalorder %s247, %s261
      %p263 = scmp.eq.s32.totalorder %s27, 0
      %p264 = por %p262, %p263
      %s266 = sadd.s32 %s265, 1
      %p269 = scmp.eq.s32.totalorder %s21, 1
      %p270 = scmp.ne.s32.totalorder %s265, %s267
      %p271 = scmp.eq.s32.totalorder %s21, 0
      %p272 = por %p270, %p271
      %p273 = scmp.ne.s32.totalorder %s265, %s267
      %p274 = scmp.eq.s32.totalorder %s26, 1
      %p275 = por %p273, %p274
      %p276 = scmp.ne.s32.totalorder %s267, %s268
      %p277 = scmp.eq.s32.totalorder %s26, 0
      %p278 = por %p276, %p277
      %p279 = scmp.ne.s32.totalorder %s267, %s268
      %p280 = scmp.eq.s32.totalorder %s27, 1
      %p281 = por %p279, %p280
      %p283 = scmp.ne.s32.totalorder %s268, %s282
      %p284 = scmp.eq.s32.totalorder %s27, 0
      %p285 = por %p283, %p284
      %s286 = ssub.s32 %s21, %s28
      %p287 = scmp.eq.s32.totalorder %s286, 0
      %s289 = sadd.s32 %s288, 1
      %s290 = scalar_select %p287, %s288, %s289
      %p293 = pneg %p287
      %p294 = scmp.eq.s32.totalorder %s21, 1
      %p295 = por %p293, %p294
      %p296 = scmp.ne.s32.totalorder %s288, %s291
      %p297 = scmp.eq.s32.totalorder %s21, 0
      %p298 = por %p296, %p297
      %p299 = scmp.ne.s32.totalorder %s288, %s291
      %p300 = scmp.eq.s32.totalorder %s26, 1
      %p301 = por %p299, %p300
      %p302 = scmp.ne.s32.totalorder %s291, %s292
      %p303 = scmp.eq.s32.totalorder %s26, 0
      %p304 = por %p302, %p303
      %p305 = scmp.ne.s32.totalorder %s291, %s292
      %p306 = scmp.eq.s32.totalorder %s27, 1
      %p307 = por %p305, %p306
      %p309 = scmp.ne.s32.totalorder %s292, %s308
      %p310 = scmp.eq.s32.totalorder %s27, 0
      %p311 = por %p309, %p310
      %p312 = scmp.le.s32.totalorder 1, %s21
      %p313 = scmp.lt.s32.totalorder %s21, 3
      %p314 = pnand %p312, %p313
      %p315 = pneg %p314
      // Predicated region
      $region9: #{tpu_custom_call.1} parent=5 // pred_check
        _
      $region10: #{tpu_custom_call.1} parent=5 // pred_check_branch
        %317 = sbr.rel (%p314) target = $region12
      $region11: #{tpu_custom_call.1} parent=5 // pred_region
        %s318 = ssub.s32 %s21, 1
        // Predicated region
        $region13: #{tpu_custom_call.1} parent=11 // pred_check
          %p319 = pneg %p68
        $region14: #{tpu_custom_call.1} parent=11 // pred_check_branch
          %321 = sbr.rel (%p319) target = $region16
        $region15: #{tpu_custom_call.1} parent=11 // pred_region
          _
        $region16: #{tpu_custom_call.1} parent=11 // pred_fallthru
          _
        // Predicated region
        $region17: #{tpu_custom_call.1} parent=11 // pred_check
          %p322 = pneg %p89
        $region18: #{tpu_custom_call.1} parent=11 // pred_check_branch
          %324 = sbr.rel (%p322) target = $region20
        $region19: #{tpu_custom_call.1} parent=11 // pred_region
          _
        $region20: #{tpu_custom_call.1} parent=11 // pred_fallthru
          _
        // Predicated region
        $region21: #{tpu_custom_call.1} parent=11 // pred_check
          %p325 = pneg %p110
        $region22: #{tpu_custom_call.1} parent=11 // pred_check_branch
          %327 = sbr.rel (%p325) target = $region24
        $region23: #{tpu_custom_call.1} parent=11 // pred_region
          _
        $region24: #{tpu_custom_call.1} parent=11 // pred_fallthru
          _
        // Predicated region
        $region25: #{tpu_custom_call.1} parent=11 // pred_check
          %p328 = pneg %p131
        $region26: #{tpu_custom_call.1} parent=11 // pred_check_branch
          %330 = sbr.rel (%p328) target = $region28
        $region27: #{tpu_custom_call.1} parent=11 // pred_region
          _
        $region28: #{tpu_custom_call.1} parent=11 // pred_fallthru
          _
        // Predicated region
        $region29: #{tpu_custom_call.1} parent=11 // pred_check
          %p331 = pneg %p152
        $region30: #{tpu_custom_call.1} parent=11 // pred_check_branch
          %333 = sbr.rel (%p331) target = $region32
        $region31: #{tpu_custom_call.1} parent=11 // pred_region
          _
        $region32: #{tpu_custom_call.1} parent=11 // pred_fallthru
          _
        // Predicated region
        $region33: #{tpu_custom_call.1} parent=11 // pred_check
          %p334 = pneg %p173
        $region34: #{tpu_custom_call.1} parent=11 // pred_check_branch
          %336 = sbr.rel (%p334) target = $region36
        $region35: #{tpu_custom_call.1} parent=11 // pred_region
          _
        $region36: #{tpu_custom_call.1} parent=11 // pred_fallthru
          _
        // Predicated region
        $region37: #{tpu_custom_call.1} parent=11 // pred_check
          %p337 = pneg %p194
        $region38: #{tpu_custom_call.1} parent=11 // pred_check_branch
          %339 = sbr.rel (%p337) target = $region40
        $region39: #{tpu_custom_call.1} parent=11 // pred_region
          _
        $region40: #{tpu_custom_call.1} parent=11 // pred_fallthru
          _
        // Predicated region
        $region41: #{tpu_custom_call.1} parent=11 // pred_check
          %p340 = pneg %p215
        $region42: #{tpu_custom_call.1} parent=11 // pred_check_branch
          %342 = sbr.rel (%p340) target = $region44
        $region43: #{tpu_custom_call.1} parent=11 // pred_region
          _
        $region44: #{tpu_custom_call.1} parent=11 // pred_fallthru
          _
        // Predicated region
        $region45: #{tpu_custom_call.1} parent=11 // pred_check
          %p343 = pneg %p236
        $region46: #{tpu_custom_call.1} parent=11 // pred_check_branch
          %345 = sbr.rel (%p343) target = $region48
        $region47: #{tpu_custom_call.1} parent=11 // pred_region
          _
        $region48: #{tpu_custom_call.1} parent=11 // pred_fallthru
          _
        // Predicated region
        $region49: #{tpu_custom_call.1} parent=11 // pred_check
          %p346 = pneg %p257
        $region50: #{tpu_custom_call.1} parent=11 // pred_check_branch
          %348 = sbr.rel (%p346) target = $region52
        $region51: #{tpu_custom_call.1} parent=11 // pred_region
          _
        $region52: #{tpu_custom_call.1} parent=11 // pred_fallthru
          _
        // Predicated region
        $region53: #{tpu_custom_call.1} parent=11 // pred_check
          %p349 = pneg %p278
        $region54: #{tpu_custom_call.1} parent=11 // pred_check_branch
          %351 = sbr.rel (%p349) target = $region56
        $region55: #{tpu_custom_call.1} parent=11 // pred_region
          _
        $region56: #{tpu_custom_call.1} parent=11 // pred_fallthru
          _
      $region12: #{tpu_custom_call.1} parent=5 // pred_fallthru
        _
      %p352 = scmp.lt.s32.totalorder %s21, 2
      // Predicated region
      $region57: #{tpu_custom_call.1} parent=5 // pred_check
        %p353 = pneg %p352
      $region58: #{tpu_custom_call.1} parent=5 // pred_check_branch
        %355 = sbr.rel (%p353) target = $region60
      $region59: #{tpu_custom_call.1} parent=5 // pred_region
        // Predicated region
        $region61: #{tpu_custom_call.1} parent=59 // pred_check
          %p356 = pneg %p41
        $region62: #{tpu_custom_call.1} parent=59 // pred_check_branch
          %358 = sbr.rel (%p356) target = $region64
        $region63: #{tpu_custom_call.1} parent=59 // pred_region
          %p359 = scmp.lt.s32.totalorder %s21, 1
          %s360 = scalar_select %p359, %s21, 1
          %s361 = smul.addr %s360, 8
          %s362 = scalar_lea.vmem %s0, %s361
        $region64: #{tpu_custom_call.1} parent=59 // pred_fallthru
          _
      $region60: #{tpu_custom_call.1} parent=5 // pred_fallthru
        _
      %p363 = scmp.le.s32.totalorder 1, %s21
      %p364 = scmp.lt.s32.totalorder %s21, 3
      %p365 = pnand %p363, %p364
      %p366 = pneg %p365
      // Predicated region
      $region65: #{tpu_custom_call.1} parent=5 // pred_check
        _
      $region66: #{tpu_custom_call.1} parent=5 // pred_check_branch
        %368 = sbr.rel (%p365) target = $region68
      $region67: #{tpu_custom_call.1} parent=5 // pred_region
        %s369 = ssub.s32 %s21, 1
        %p370 = scmp.lt.s32.totalorder %s26, 1
        %s371 = scalar_select %p370, %s26, 1
        %s372 = smul.addr %s371, 8
        %s373 = scalar_lea.vmem %s0, %s372
        %p374 = pneg %p47
        %p375 = pneg %p44
        %p376 = pneg %p68
        %p377 = pneg %p65
        %p378 = pneg %p89
        %p379 = pneg %p86
        %p380 = pneg %p110
        %p381 = pneg %p107
        %p382 = pneg %p131
        %p383 = pneg %p128
        %p384 = pneg %p152
        %p385 = pneg %p149
        %p386 = pneg %p173
        %p387 = pneg %p170
        %p388 = pneg %p194
        %p389 = pneg %p191
        %p390 = pneg %p215
        %p391 = pneg %p212
        %p392 = pneg %p236
        %p393 = pneg %p233
        %p394 = pneg %p257
        %p395 = pneg %p254
        %p396 = pneg %p278
        %p397 = pneg %p275
        %p398 = pneg %p304
        %p399 = pneg %p301
        %s400 = sand.u32 %s291, 1
        %s401 = scalar_lea.sflag [#allocation3], %s400
        %s402 = sand.u32 %s291, 1
        %s403 = smul.addr %s402, 8
        %s404 = scalar_lea.vmem [#allocation2], %s403
        %p405 = scmp.lt.s32.totalorder %s26, 1
        %s406 = scalar_select %p405, %s26, 1
        %s407 = smul.addr %s406, 8
        %s408 = scalar_lea.vmem %s0, %s407
        %v410 = vld [vmem:[%s408] sm:$0xff]
        %v411 = vld [vmem:[%s1] sm:$0x1]
        %v412 = vld [vmem:[%s2] sm:$0x1]
        %vm413 = vcmask 261120
        %v414 = vsel %vm413, %v410, 0.0
        %415 = vadd.xlane.f32.xlu0 %v414
        %v416 = vpop.xlane.xlu0 %415
        %v417 = vrcp.pop 32.0
        %v418 = vmul.f32 %v416, %v417
        %v419 = vsub.f32 %v410, %v418
        %v420 = vmul.f32 %v419, %v419
        %v421 = vsel %vm413, %v420, 0.0
        %422 = vadd.xlane.f32.xlu0 %v421
        %v423 = vpop.xlane.xlu0 %422
        %v424 = vmul.f32 %v423, %v417
        %v425 = vadd.f32 %v424, 1e-06
        %v426 = vrsqrt.pop %v425
        %v427 = vmul.f32 %v419, %v426
        %v429 = vlaneseq
        %v430 = vshrl.u32 %v429, 7
        %v431 = vsub.s32 0, %v430
        %v432 = vrot.slane %v411, %v431
        %v434 = vmul.f32 %v427, %v432
        %v436 = vlaneseq
        %v437 = vshrl.u32 %v436, 7
        %v438 = vsub.s32 0, %v437
        %v439 = vrot.slane %v412, %v438
        %v441 = vadd.f32 %v434, %v439
        %v442 = vpack.c.bf16 %v441, %v441
        %v443 = vld [vmem:[%s3] sm:$0xf]
        %v444 = vld [vmem:[%s3 + $0x4] sm:$0xf]
        %v445 = vld [vmem:[%s3 + $0x8] sm:$0xf]
        %v446 = vld [vmem:[%s3 + $0xc] sm:$0xf]
        %v451 = vunpack.c.l.b16 %v443
        %v452 = vunpack.c.l.b16 %v444
        %v453 = vunpack.c.l.b16 %v445
        %v454 = vunpack.c.l.b16 %v446
        %v455 = vpack.c.b16 %v452, %v451
        %v456 = vpack.c.b16 %v454, %v453
        %v460 = vsel %vm413, %v442, 0
        %462 = vmatprep.subr.bf16.mxu0 0
        %463 = vmatpush1.bf16.msra.mxu0 %v455
        %464 = vmatprep.subr.bf16.mxu0 0
        %465 = vmatpush1.bf16.msra.mxu0 %v456
        %466 = vmatprep.subr.bf16.mxu0 0
        %467 = vmatpush1.bf16.msra.mxu0 0
        %468 = vmatprep.subr.bf16.mxu0 0
        %469 = vmatpush1.bf16.msra.mxu0 0
        %470 = vmatprep.subr.bf16.mxu0 0
        %471 = vmatpush1.bf16.msra.mxu0 0
        %472 = vmatprep.subr.bf16.mxu0 0
        %473 = vmatpush1.bf16.msra.mxu0 0
        %474 = vmatprep.subr.bf16.mxu0 0
        %475 = vmatpush1.bf16.msra.mxu0 0
        %476 = vmatprep.subr.bf16.mxu0 0
        %477 = vmatpush1.bf16.msra.mxu0 0
        %478 = vmatprep.subr.bf16.mxu0 0
        %479 = vmatpush1.bf16.msra.mxu0 0
        %480 = vmatprep.subr.bf16.mxu0 0
        %481 = vmatpush1.bf16.msra.mxu0 0
        %482 = vmatprep.subr.bf16.mxu0 0
        %483 = vmatpush1.bf16.msra.mxu0 0
        %484 = vmatprep.subr.bf16.mxu0 0
        %485 = vmatpush1.bf16.msra.mxu0 0
        %486 = vmatprep.subr.bf16.mxu0 0
        %487 = vmatpush1.bf16.msra.mxu0 0
        %488 = vmatprep.subr.bf16.mxu0 0
        %489 = vmatpush1.bf16.msra.mxu0 0
        %490 = vmatprep.subr.bf16.mxu0 0
        %491 = vmatpush1.bf16.msra.mxu0 0
        %492 = vmatprep.subr.bf16.mxu0 0
        %493 = vmatpush1.bf16.msra.mxu0 0
        %494 = vmatprep.mubr.bf16.mxu0 0
        %495 = vmatmul.mubr.bf16.gmra.mrb[0].mxu0 %v460
        %v496 = vpop.f32.mrb[0].mxu0
        %v497 = vadd.f32 0.0, %v496
        %v498 = vpop.f32.mrb[0].mxu0
        %v499 = vpop.f32.mrb[0].mxu0
        %v500 = vpop.f32.mrb[0].mxu0
        %501 = vdwg.mxu0
        %v502 = vpack.c.bf16 %v497, %v497
        %504 = vrot.lane.b32.xlu0 %v502, 96
        %v505 = vpop.permute.xlu0 %504
        %vm506 = vcmask 64512
        %v508 = vsel %vm506, %v502, 0
        %v511 = vsel %vm506, %v505, 0
        %513 = vmatprep.subr.bf16.mxu0 0
        %514 = vmatpush1.bf16.xpose.msra.mxu0 %v511
        %515 = vmatprep.subr.bf16.mxu0 0
        %516 = vmatpush1.bf16.xpose.msra.mxu0 0
        %517 = vmatprep.subr.bf16.mxu0 0
        %518 = vmatpush1.bf16.xpose.msra.mxu0 0
        %519 = vmatprep.subr.bf16.mxu0 0
        %520 = vmatpush1.bf16.xpose.msra.mxu0 0
        %521 = vmatprep.subr.bf16.mxu0 0
        %522 = vmatpush1.bf16.xpose.msra.mxu0 0
        %523 = vmatprep.subr.bf16.mxu0 0
        %524 = vmatpush1.bf16.xpose.msra.mxu0 0
        %525 = vmatprep.subr.bf16.mxu0 0
        %526 = vmatpush1.bf16.xpose.msra.mxu0 0
        %527 = vmatprep.subr.bf16.mxu0 0
        %528 = vmatpush1.bf16.xpose.msra.mxu0 0
        %529 = vmatprep.subr.bf16.mxu0 0
        %530 = vmatpush1.bf16.xpose.msra.mxu0 0
        %531 = vmatprep.subr.bf16.mxu0 0
        %532 = vmatpush1.bf16.xpose.msra.mxu0 0
        %533 = vmatprep.subr.bf16.mxu0 0
        %534 = vmatpush1.bf16.xpose.msra.mxu0 0
        %535 = vmatprep.subr.bf16.mxu0 0
        %536 = vmatpush1.bf16.xpose.msra.mxu0 0
        %537 = vmatprep.subr.bf16.mxu0 0
        %538 = vmatpush1.bf16.xpose.msra.mxu0 0
        %539 = vmatprep.subr.bf16.mxu0 0
        %540 = vmatpush1.bf16.xpose.msra.mxu0 0
        %541 = vmatprep.subr.bf16.mxu0 0
        %542 = vmatpush1.bf16.xpose.msra.mxu0 0
        %543 = vmatprep.subr.bf16.mxu0 0
        %544 = vmatpush1.bf16.xpose.msra.mxu0 0
        %545 = vmatprep.mubr.bf16.mxu0 0
        %546 = vmatmul.mubr.bf16.gmra.mrb[0].mxu0 %v508
        %v547 = vpop.f32.mrb[0].mxu0
        %v548 = vadd.f32 0.0, %v547
        %v549 = vpop.f32.mrb[0].mxu0
        %v550 = vpop.f32.mrb[0].mxu0
        %v551 = vpop.f32.mrb[0].mxu0
        %552 = vdwg.mxu0
        %v553 = vsel %vm506, %v548, -inf
        %554 = vmax.xlane.f32.xlu0 %v553
        %v555 = vpop.xlane.xlu0 %554
        %v556 = vsub.f32 %v548, %v555
        %v557 = vmul.f32 %v556, 1.442695
        %v558 = vpow.pop %v557
        %v559 = vsel %vm506, %v558, 0.0
        %560 = vadd.xlane.f32.xlu0 %v559
        %v561 = vpop.xlane.xlu0 %560
        %v562 = vrcp.pop %v561
        %v563 = vmul.f32 %v558, %v562
        %v564 = vpack.c.bf16 %v563, %v563
        %565 = vrot.lane.b32.xlu0 %v502, 64
        %v566 = vpop.permute.xlu0 %565
        %v568 = vsel %vm506, %v564, 0
        %vm570 = vcmask 1043456
        %v572 = vsel %vm570, %v566, 0
        %574 = vmatprep.subr.bf16.mxu0 0
        %575 = vmatpush1.bf16.msra.mxu0 %v572
        %576 = vmatprep.subr.bf16.mxu0 0
        %577 = vmatpush1.bf16.msra.mxu0 0
        %578 = vmatprep.subr.bf16.mxu0 0
        %579 = vmatpush1.bf16.msra.mxu0 0
        %580 = vmatprep.subr.bf16.mxu0 0
        %581 = vmatpush1.bf16.msra.mxu0 0
        %582 = vmatprep.subr.bf16.mxu0 0
        %583 = vmatpush1.bf16.msra.mxu0 0
        %584 = vmatprep.subr.bf16.mxu0 0
        %585 = vmatpush1.bf16.msra.mxu0 0
        %586 = vmatprep.subr.bf16.mxu0 0
        %587 = vmatpush1.bf16.msra.mxu0 0
        %588 = vmatprep.subr.bf16.mxu0 0
        %589 = vmatpush1.bf16.msra.mxu0 0
        %590 = vmatprep.subr.bf16.mxu0 0
        %591 = vmatpush1.bf16.msra.mxu0 0
        %592 = vmatprep.subr.bf16.mxu0 0
        %593 = vmatpush1.bf16.msra.mxu0 0
        %594 = vmatprep.subr.bf16.mxu0 0
        %595 = vmatpush1.bf16.msra.mxu0 0
        %596 = vmatprep.subr.bf16.mxu0 0
        %597 = vmatpush1.bf16.msra.mxu0 0
        %598 = vmatprep.subr.bf16.mxu0 0
        %599 = vmatpush1.bf16.msra.mxu0 0
        %600 = vmatprep.subr.bf16.mxu0 0
        %601 = vmatpush1.bf16.msra.mxu0 0
        %602 = vmatprep.subr.bf16.mxu0 0
        %603 = vmatpush1.bf16.msra.mxu0 0
        %604 = vmatprep.subr.bf16.mxu0 0
        %605 = vmatpush1.bf16.msra.mxu0 0
        %606 = vmatprep.mubr.bf16.mxu0 0
        %607 = vmatmul.mubr.bf16.gmra.mrb[0].mxu0 %v568
        %v608 = vpop.f32.mrb[0].mxu0
        %v609 = vadd.f32 0.0, %v608
        %v610 = vpop.f32.mrb[0].mxu0
        %v611 = vpop.f32.mrb[0].mxu0
        %v612 = vpop.f32.mrb[0].mxu0
        %613 = vdwg.mxu0
        %614 = vrot.lane.b32.xlu0 %v502, 120
        %v615 = vpop.permute.xlu0 %614
        %616 = vrot.lane.b32.xlu0 %v502, 88
        %v617 = vpop.permute.xlu0 %616
        %v619 = vsel %vm506, %v615, 0
        %v622 = vsel %vm506, %v617, 0
        %624 = vmatprep.subr.bf16.mxu0 0
        %625 = vmatpush1.bf16.xpose.msra.mxu0 %v622
        %626 = vmatprep.subr.bf16.mxu0 0
        %627 = vmatpush1.bf16.xpose.msra.mxu0 0
        %628 = vmatprep.subr.bf16.mxu0 0
        %629 = vmatpush1.bf16.xpose.msra.mxu0 0
        %630 = vmatprep.subr.bf16.mxu0 0
        %631 = vmatpush1.bf16.xpose.msra.mxu0 0
        %632 = vmatprep.subr.bf16.mxu0 0
        %633 = vmatpush1.bf16.xpose.msra.mxu0 0
        %634 = vmatprep.subr.bf16.mxu0 0
        %635 = vmatpush1.bf16.xpose.msra.mxu0 0
        %636 = vmatprep.subr.bf16.mxu0 0
        %637 = vmatpush1.bf16.xpose.msra.mxu0 0
        %638 = vmatprep.subr.bf16.mxu0 0
        %639 = vmatpush1.bf16.xpose.msra.mxu0 0
        %640 = vmatprep.subr.bf16.mxu0 0
        %641 = vmatpush1.bf16.xpose.msra.mxu0 0
        %642 = vmatprep.subr.bf16.mxu0 0
        %643 = vmatpush1.bf16.xpose.msra.mxu0 0
        %644 = vmatprep.subr.bf16.mxu0 0
        %645 = vmatpush1.bf16.xpose.msra.mxu0 0
        %646 = vmatprep.subr.bf16.mxu0 0
        %647 = vmatpush1.bf16.xpose.msra.mxu0 0
        %648 = vmatprep.subr.bf16.mxu0 0
        %649 = vmatpush1.bf16.xpose.msra.mxu0 0
        %650 = vmatprep.subr.bf16.mxu0 0
        %651 = vmatpush1.bf16.xpose.msra.mxu0 0
        %652 = vmatprep.subr.bf16.mxu0 0
        %653 = vmatpush1.bf16.xpose.msra.mxu0 0
        %654 = vmatprep.subr.bf16.mxu0 0
        %655 = vmatpush1.bf16.xpose.msra.mxu0 0
        %656 = vmatprep.mubr.bf16.mxu0 0
        %657 = vmatmul.mubr.bf16.gmra.mrb[0].mxu0 %v619
        %v658 = vpop.f32.mrb[0].mxu0
        %v659 = vadd.f32 0.0, %v658
        %v660 = vpop.f32.mrb[0].mxu0
        %v661 = vpop.f32.mrb[0].mxu0
        %v662 = vpop.f32.mrb[0].mxu0
        %663 = vdwg.mxu0
        %v664 = vsel %vm506, %v659, -inf
        %665 = vmax.xlane.f32.xlu0 %v664
        %v666 = vpop.xlane.xlu0 %665
        %v667 = vsub.f32 %v659, %v666
        %v668 = vmul.f32 %v667, 1.442695
        %v669 = vpow.pop %v668
        %v670 = vsel %vm506, %v669, 0.0
        %671 = vadd.xlane.f32.xlu0 %v670
        %v672 = vpop.xlane.xlu0 %671
        %v673 = vrcp.pop %v672
        %v674 = vmul.f32 %v669, %v673
        %v675 = vpack.c.bf16 %v674, %v674
        %676 = vrot.lane.b32.xlu0 %v502, 56
        %v677 = vpop.permute.xlu0 %676
        %v679 = vsel %vm506, %v675, 0
        %v682 = vsel %vm570, %v677, 0
        %684 = vmatprep.subr.bf16.mxu0 0
        %685 = vmatpush1.bf16.msra.mxu0 %v682
        %686 = vmatprep.subr.bf16.mxu0 0
        %687 = vmatpush1.bf16.msra.mxu0 0
        %688 = vmatprep.subr.bf16.mxu0 0
        %689 = vmatpush1.bf16.msra.mxu0 0
        %690 = vmatprep.subr.bf16.mxu0 0
        %691 = vmatpush1.bf16.msra.mxu0 0
        %692 = vmatprep.subr.bf16.mxu0 0
        %693 = vmatpush1.bf16.msra.mxu0 0
        %694 = vmatprep.subr.bf16.mxu0 0
        %695 = vmatpush1.bf16.msra.mxu0 0
        %696 = vmatprep.subr.bf16.mxu0 0
        %697 = vmatpush1.bf16.msra.mxu0 0
        %698 = vmatprep.subr.bf16.mxu0 0
        %699 = vmatpush1.bf16.msra.mxu0 0
        %700 = vmatprep.subr.bf16.mxu0 0
        %701 = vmatpush1.bf16.msra.mxu0 0
        %702 = vmatprep.subr.bf16.mxu0 0
        %703 = vmatpush1.bf16.msra.mxu0 0
        %704 = vmatprep.subr.bf16.mxu0 0
        %705 = vmatpush1.bf16.msra.mxu0 0
        %706 = vmatprep.subr.bf16.mxu0 0
        %707 = vmatpush1.bf16.msra.mxu0 0
        %708 = vmatprep.subr.bf16.mxu0 0
        %709 = vmatpush1.bf16.msra.mxu0 0
        %710 = vmatprep.subr.bf16.mxu0 0
        %711 = vmatpush1.bf16.msra.mxu0 0
        %712 = vmatprep.subr.bf16.mxu0 0
        %713 = vmatpush1.bf16.msra.mxu0 0
        %714 = vmatprep.subr.bf16.mxu0 0
        %715 = vmatpush1.bf16.msra.mxu0 0
        %716 = vmatprep.mubr.bf16.mxu0 0
        %717 = vmatmul.mubr.bf16.gmra.mrb[0].mxu0 %v679
        %v718 = vpop.f32.mrb[0].mxu0
        %v719 = vadd.f32 0.0, %v718
        %v720 = vpop.f32.mrb[0].mxu0
        %v721 = vpop.f32.mrb[0].mxu0
        %v722 = vpop.f32.mrb[0].mxu0
        %723 = vdwg.mxu0
        %724 = vrot.lane.b32.xlu0 %v502, 112
        %v725 = vpop.permute.xlu0 %724
        %726 = vrot.lane.b32.xlu0 %v502, 80
        %v727 = vpop.permute.xlu0 %726
        %v729 = vsel %vm506, %v725, 0
        %v732 = vsel %vm506, %v727, 0
        %734 = vmatprep.subr.bf16.mxu0 0
        %735 = vmatpush1.bf16.xpose.msra.mxu0 %v732
        %736 = vmatprep.subr.bf16.mxu0 0
        %737 = vmatpush1.bf16.xpose.msra.mxu0 0
        %738 = vmatprep.subr.bf16.mxu0 0
        %739 = vmatpush1.bf16.xpose.msra.mxu0 0
        %740 = vmatprep.subr.bf16.mxu0 0
        %741 = vmatpush1.bf16.xpose.msra.mxu0 0
        %742 = vmatprep.subr.bf16.mxu0 0
        %743 = vmatpush1.bf16.xpose.msra.mxu0 0
        %744 = vmatprep.subr.bf16.mxu0 0
        %745 = vmatpush1.bf16.xpose.msra.mxu0 0
        %746 = vmatprep.subr.bf16.mxu0 0
        %747 = vmatpush1.bf16.xpose.msra.mxu0 0
        %748 = vmatprep.subr.bf16.mxu0 0
        %749 = vmatpush1.bf16.xpose.msra.mxu0 0
        %750 = vmatprep.subr.bf16.mxu0 0
        %751 = vmatpush1.bf16.xpose.msra.mxu0 0
        %752 = vmatprep.subr.bf16.mxu0 0
        %753 = vmatpush1.bf16.xpose.msra.mxu0 0
        %754 = vmatprep.subr.bf16.mxu0 0
        %755 = vmatpush1.bf16.xpose.msra.mxu0 0
        %756 = vmatprep.subr.bf16.mxu0 0
        %757 = vmatpush1.bf16.xpose.msra.mxu0 0
        %758 = vmatprep.subr.bf16.mxu0 0
        %759 = vmatpush1.bf16.xpose.msra.mxu0 0
        %760 = vmatprep.subr.bf16.mxu0 0
        %761 = vmatpush1.bf16.xpose.msra.mxu0 0
        %762 = vmatprep.subr.bf16.mxu0 0
        %763 = vmatpush1.bf16.xpose.msra.mxu0 0
        %764 = vmatprep.subr.bf16.mxu0 0
        %765 = vmatpush1.bf16.xpose.msra.mxu0 0
        %766 = vmatprep.mubr.bf16.mxu0 0
        %767 = vmatmul.mubr.bf16.gmra.mrb[0].mxu0 %v729
        %v768 = vpop.f32.mrb[0].mxu0
        %v769 = vadd.f32 0.0, %v768
        %v770 = vpop.f32.mrb[0].mxu0
        %v771 = vpop.f32.mrb[0].mxu0
        %v772 = vpop.f32.mrb[0].mxu0
        %773 = vdwg.mxu0
        %v774 = vsel %vm506, %v769, -inf
        %775 = vmax.xlane.f32.xlu0 %v774
        %v776 = vpop.xlane.xlu0 %775
        %v777 = vsub.f32 %v769, %v776
        %v778 = vmul.f32 %v777, 1.442695
        %v779 = vpow.pop %v778
        %v780 = vsel %vm506, %v779, 0.0
        %781 = vadd.xlane.f32.xlu0 %v780
        %v782 = vpop.xlane.xlu0 %781
        %v783 = vrcp.pop %v782
        %v784 = vmul.f32 %v779, %v783
        %v785 = vpack.c.bf16 %v784, %v784
        %786 = vrot.lane.b32.xlu0 %v502, 48
        %v787 = vpop.permute.xlu0 %786
        %v789 = vsel %vm506, %v785, 0
        %v792 = vsel %vm570, %v787, 0
        %794 = vmatprep.subr.bf16.mxu0 0
        %795 = vmatpush1.bf16.msra.mxu0 %v792
        %796 = vmatprep.subr.bf16.mxu0 0
        %797 = vmatpush1.bf16.msra.mxu0 0
        %798 = vmatprep.subr.bf16.mxu0 0
        %799 = vmatpush1.bf16.msra.mxu0 0
        %800 = vmatprep.subr.bf16.mxu0 0
        %801 = vmatpush1.bf16.msra.mxu0 0
        %802 = vmatprep.subr.bf16.mxu0 0
        %803 = vmatpush1.bf16.msra.mxu0 0
        %804 = vmatprep.subr.bf16.mxu0 0
        %805 = vmatpush1.bf16.msra.mxu0 0
        %806 = vmatprep.subr.bf16.mxu0 0
        %807 = vmatpush1.bf16.msra.mxu0 0
        %808 = vmatprep.subr.bf16.mxu0 0
        %809 = vmatpush1.bf16.msra.mxu0 0
        %810 = vmatprep.subr.bf16.mxu0 0
        %811 = vmatpush1.bf16.msra.mxu0 0
        %812 = vmatprep.subr.bf16.mxu0 0
        %813 = vmatpush1.bf16.msra.mxu0 0
        %814 = vmatprep.subr.bf16.mxu0 0
        %815 = vmatpush1.bf16.msra.mxu0 0
        %816 = vmatprep.subr.bf16.mxu0 0
        %817 = vmatpush1.bf16.msra.mxu0 0
        %818 = vmatprep.subr.bf16.mxu0 0
        %819 = vmatpush1.bf16.msra.mxu0 0
        %820 = vmatprep.subr.bf16.mxu0 0
        %821 = vmatpush1.bf16.msra.mxu0 0
        %822 = vmatprep.subr.bf16.mxu0 0
        %823 = vmatpush1.bf16.msra.mxu0 0
        %824 = vmatprep.subr.bf16.mxu0 0
        %825 = vmatpush1.bf16.msra.mxu0 0
        %826 = vmatprep.mubr.bf16.mxu0 0
        %827 = vmatmul.mubr.bf16.gmra.mrb[0].mxu0 %v789
        %v828 = vpop.f32.mrb[0].mxu0
        %v829 = vadd.f32 0.0, %v828
        %v830 = vpop.f32.mrb[0].mxu0
        %v831 = vpop.f32.mrb[0].mxu0
        %v832 = vpop.f32.mrb[0].mxu0
        %833 = vdwg.mxu0
        %834 = vrot.lane.b32.xlu0 %v502, 104
        %v835 = vpop.permute.xlu0 %834
        %836 = vrot.lane.b32.xlu0 %v502, 72
        %v837 = vpop.permute.xlu0 %836
        %v839 = vsel %vm506, %v835, 0
        %v842 = vsel %vm506, %v837, 0
        %844 = vmatprep.subr.bf16.mxu0 0
        %845 = vmatpush1.bf16.xpose.msra.mxu0 %v842
        %846 = vmatprep.subr.bf16.mxu0 0
        %847 = vmatpush1.bf16.xpose.msra.mxu0 0
        %848 = vmatprep.subr.bf16.mxu0 0
        %849 = vmatpush1.bf16.xpose.msra.mxu0 0
        %850 = vmatprep.subr.bf16.mxu0 0
        %851 = vmatpush1.bf16.xpose.msra.mxu0 0
        %852 = vmatprep.subr.bf16.mxu0 0
        %853 = vmatpush1.bf16.xpose.msra.mxu0 0
        %854 = vmatprep.subr.bf16.mxu0 0
        %855 = vmatpush1.bf16.xpose.msra.mxu0 0
        %856 = vmatprep.subr.bf16.mxu0 0
        %857 = vmatpush1.bf16.xpose.msra.mxu0 0
        %858 = vmatprep.subr.bf16.mxu0 0
        %859 = vmatpush1.bf16.xpose.msra.mxu0 0
        %860 = vmatprep.subr.bf16.mxu0 0
        %861 = vmatpush1.bf16.xpose.msra.mxu0 0
        %862 = vmatprep.subr.bf16.mxu0 0
        %863 = vmatpush1.bf16.xpose.msra.mxu0 0
        %864 = vmatprep.subr.bf16.mxu0 0
        %865 = vmatpush1.bf16.xpose.msra.mxu0 0
        %866 = vmatprep.subr.bf16.mxu0 0
        %867 = vmatpush1.bf16.xpose.msra.mxu0 0
        %868 = vmatprep.subr.bf16.mxu0 0
        %869 = vmatpush1.bf16.xpose.msra.mxu0 0
        %870 = vmatprep.subr.bf16.mxu0 0
        %871 = vmatpush1.bf16.xpose.msra.mxu0 0
        %872 = vmatprep.subr.bf16.mxu0 0
        %873 = vmatpush1.bf16.xpose.msra.mxu0 0
        %874 = vmatprep.subr.bf16.mxu0 0
        %875 = vmatpush1.bf16.xpose.msra.mxu0 0
        %876 = vmatprep.mubr.bf16.mxu0 0
        %877 = vmatmul.mubr.bf16.gmra.mrb[0].mxu0 %v839
        %v878 = vpop.f32.mrb[0].mxu0
        %v879 = vadd.f32 0.0, %v878
        %v880 = vpop.f32.mrb[0].mxu0
        %v881 = vpop.f32.mrb[0].mxu0
        %v882 = vpop.f32.mrb[0].mxu0
        %883 = vdwg.mxu0
        %v884 = vsel %vm506, %v879, -inf
        %885 = vmax.xlane.f32.xlu0 %v884
        %v886 = vpop.xlane.xlu0 %885
        %v887 = vsub.f32 %v879, %v886
        %v888 = vmul.f32 %v887, 1.442695
        %v889 = vpow.pop %v888
        %v890 = vsel %vm506, %v889, 0.0
        %891 = vadd.xlane.f32.xlu0 %v890
        %v892 = vpop.xlane.xlu0 %891
        %v893 = vrcp.pop %v892
        %v894 = vmul.f32 %v889, %v893
        %v895 = vpack.c.bf16 %v894, %v894
        %896 = vrot.lane.b32.xlu0 %v502, 40
        %v897 = vpop.permute.xlu0 %896
        %v899 = vsel %vm506, %v895, 0
        %v902 = vsel %vm570, %v897, 0
        %904 = vmatprep.subr.bf16.mxu0 0
        %905 = vmatpush1.bf16.msra.mxu0 %v902
        %906 = vmatprep.subr.bf16.mxu0 0
        %907 = vmatpush1.bf16.msra.mxu0 0
        %908 = vmatprep.subr.bf16.mxu0 0
        %909 = vmatpush1.bf16.msra.mxu0 0
        %910 = vmatprep.subr.bf16.mxu0 0
        %911 = vmatpush1.bf16.msra.mxu0 0
        %912 = vmatprep.subr.bf16.mxu0 0
        %913 = vmatpush1.bf16.msra.mxu0 0
        %914 = vmatprep.subr.bf16.mxu0 0
        %915 = vmatpush1.bf16.msra.mxu0 0
        %916 = vmatprep.subr.bf16.mxu0 0
        %917 = vmatpush1.bf16.msra.mxu0 0
        %918 = vmatprep.subr.bf16.mxu0 0
        %919 = vmatpush1.bf16.msra.mxu0 0
        %920 = vmatprep.subr.bf16.mxu0 0
        %921 = vmatpush1.bf16.msra.mxu0 0
        %922 = vmatprep.subr.bf16.mxu0 0
        %923 = vmatpush1.bf16.msra.mxu0 0
        %924 = vmatprep.subr.bf16.mxu0 0
        %925 = vmatpush1.bf16.msra.mxu0 0
        %926 = vmatprep.subr.bf16.mxu0 0
        %927 = vmatpush1.bf16.msra.mxu0 0
        %928 = vmatprep.subr.bf16.mxu0 0
        %929 = vmatpush1.bf16.msra.mxu0 0
        %930 = vmatprep.subr.bf16.mxu0 0
        %931 = vmatpush1.bf16.msra.mxu0 0
        %932 = vmatprep.subr.bf16.mxu0 0
        %933 = vmatpush1.bf16.msra.mxu0 0
        %934 = vmatprep.subr.bf16.mxu0 0
        %935 = vmatpush1.bf16.msra.mxu0 0
        %936 = vmatprep.mubr.bf16.mxu0 0
        %937 = vmatmul.mubr.bf16.gmra.mrb[0].mxu0 %v899
        %v938 = vpop.f32.mrb[0].mxu0
        %v939 = vadd.f32 0.0, %v938
        %v940 = vpop.f32.mrb[0].mxu0
        %v941 = vpop.f32.mrb[0].mxu0
        %v942 = vpop.f32.mrb[0].mxu0
        %943 = vdwg.mxu0
        %945 = vrot.lane.b32.xlu0 %v719, 8
        %v946 = vpop.permute.xlu0 %945
        %949 = vrot.lane.b32.xlu0 %v829, 16
        %v950 = vpop.permute.xlu0 %949
        %953 = vrot.lane.b32.xlu0 %v939, 24
        %v954 = vpop.permute.xlu0 %953
        %v956 = vsel %vm506, %v609, %v946
        %vm957 = vcmask 130048
        %v958 = vsel %vm957, %v956, %v950
        %vm959 = vcmask 195584
        %v960 = vsel %vm959, %v958, %v954
        %v961 = vpack.c.bf16 %v960, %v960
        %v962 = vld [vmem:[%s4] sm:$0xf]
        %v963 = vld [vmem:[%s4 + $0x4] sm:$0xf]
        %v964 = vld [vmem:[%s4 + $0x8] sm:$0xf]
        %v965 = vld [vmem:[%s4 + $0xc] sm:$0xf]
        %v970 = vunpack.c.l.b16 %v962
        %v971 = vunpack.c.l.b16 %v963
        %v972 = vunpack.c.l.b16 %v964
        %v973 = vunpack.c.l.b16 %v965
        %v974 = vpack.c.b16 %v971, %v970
        %v975 = vpack.c.b16 %v973, %v972
        %v979 = vsel %vm413, %v961, 0
        %981 = vmatprep.subr.bf16.mxu0 0
        %982 = vmatpush1.bf16.msra.mxu0 %v974
        %983 = vmatprep.subr.bf16.mxu0 0
        %984 = vmatpush1.bf16.msra.mxu0 %v975
        %985 = vmatprep.subr.bf16.mxu0 0
        %986 = vmatpush1.bf16.msra.mxu0 0
        %987 = vmatprep.subr.bf16.mxu0 0
        %988 = vmatpush1.bf16.msra.mxu0 0
        %989 = vmatprep.subr.bf16.mxu0 0
        %990 = vmatpush1.bf16.msra.mxu0 0
        %991 = vmatprep.subr.bf16.mxu0 0
        %992 = vmatpush1.bf16.msra.mxu0 0
        %993 = vmatprep.subr.bf16.mxu0 0
        %994 = vmatpush1.bf16.msra.mxu0 0
        %995 = vmatprep.subr.bf16.mxu0 0
        %996 = vmatpush1.bf16.msra.mxu0 0
        %997 = vmatprep.subr.bf16.mxu0 0
        %998 = vmatpush1.bf16.msra.mxu0 0
        %999 = vmatprep.subr.bf16.mxu0 0
        %1000 = vmatpush1.bf16.msra.mxu0 0
        %1001 = vmatprep.subr.bf16.mxu0 0
        %1002 = vmatpush1.bf16.msra.mxu0 0
        %1003 = vmatprep.subr.bf16.mxu0 0
        %1004 = vmatpush1.bf16.msra.mxu0 0
        %1005 = vmatprep.subr.bf16.mxu0 0
        %1006 = vmatpush1.bf16.msra.mxu0 0
        %1007 = vmatprep.subr.bf16.mxu0 0
        %1008 = vmatpush1.bf16.msra.mxu0 0
        %1009 = vmatprep.subr.bf16.mxu0 0
        %1010 = vmatpush1.bf16.msra.mxu0 0
        %1011 = vmatprep.subr.bf16.mxu0 0
        %1012 = vmatpush1.bf16.msra.mxu0 0
        %1013 = vmatprep.mubr.bf16.mxu0 0
        %1014 = vmatmul.mubr.bf16.gmra.mrb[0].mxu0 %v979
        %v1015 = vpop.f32.mrb[0].mxu0
        %v1016 = vadd.f32 0.0, %v1015
        %v1017 = vpop.f32.mrb[0].mxu0
        %v1018 = vpop.f32.mrb[0].mxu0
        %v1019 = vpop.f32.mrb[0].mxu0
        %1020 = vdwg.mxu0
        %v1021 = vadd.f32 %v410, %v1016
        %v1022 = vld [vmem:[%s5] sm:$0x1]
        %v1024 = vlaneseq
        %v1025 = vshrl.u32 %v1024, 7
        %v1026 = vsub.s32 0, %v1025
        %v1027 = vrot.slane %v1022, %v1026
        %v1029 = vadd.f32 %v1021, %v1027
        %v1030 = vld [vmem:[%s6] sm:$0x1]
        %v1031 = vld [vmem:[%s7] sm:$0x1]
        %v1032 = vsel %vm413, %v1029, 0.0
        %1033 = vadd.xlane.f32.xlu0 %v1032
        %v1034 = vpop.xlane.xlu0 %1033
        %v1035 = vmul.f32 %v1034, %v417
        %v1036 = vsub.f32 %v1029, %v1035
        %v1037 = vmul.f32 %v1036, %v1036
        %v1038 = vsel %vm413, %v1037, 0.0
        %1039 = vadd.xlane.f32.xlu0 %v1038
        %v1040 = vpop.xlane.xlu0 %1039
        %v1041 = vmul.f32 %v1040, %v417
        %v1042 = vadd.f32 %v1041, 1e-06
        %v1043 = vrsqrt.pop %v1042
        %v1044 = vmul.f32 %v1036, %v1043
        %v1046 = vlaneseq
        %v1047 = vshrl.u32 %v1046, 7
        %v1048 = vsub.s32 0, %v1047
        %v1049 = vrot.slane %v1030, %v1048
        %v1051 = vmul.f32 %v1044, %v1049
        %v1053 = vlaneseq
        %v1054 = vshrl.u32 %v1053, 7
        %v1055 = vsub.s32 0, %v1054
        %v1056 = vrot.slane %v1031, %v1055
        %v1058 = vadd.f32 %v1051, %v1056
        %v1059 = vpack.c.bf16 %v1058, %v1058
        %v1060 = vld [vmem:[%s8] sm:$0xf]
        %v1061 = vld [vmem:[%s8 + $0x4] sm:$0xf]
        %v1062 = vld [vmem:[%s8 + $0x8] sm:$0xf]
        %v1063 = vld [vmem:[%s8 + $0xc] sm:$0xf]
        %v1064 = vld [vmem:[%s9] sm:$0x1]
        %v1066 = vlaneseq
        %v1067 = vshrl.u32 %v1066, 7
        %v1068 = vsub.s32 0, %v1067
        %v1069 = vrot.slane %v1064, %v1068
        %v1075 = vunpack.c.l.b16 %v1060
        %v1076 = vunpack.c.l.b16 %v1061
        %v1077 = vunpack.c.l.b16 %v1062
        %v1078 = vunpack.c.l.b16 %v1063
        %v1079 = vpack.c.b16 %v1076, %v1075
        %v1080 = vpack.c.b16 %v1078, %v1077
        %v1084 = vsel %vm413, %v1059, 0
        %1086 = vmatprep.subr.bf16.mxu0 0
        %1087 = vmatpush1.bf16.msra.mxu0 %v1079
        %1088 = vmatprep.subr.bf16.mxu0 0
        %1089 = vmatpush1.bf16.msra.mxu0 %v1080
        %1090 = vmatprep.subr.bf16.mxu0 0
        %1091 = vmatpush1.bf16.msra.mxu0 0
        %1092 = vmatprep.subr.bf16.mxu0 0
        %1093 = vmatpush1.bf16.msra.mxu0 0
        %1094 = vmatprep.subr.bf16.mxu0 0
        %1095 = vmatpush1.bf16.msra.mxu0 0
        %1096 = vmatprep.subr.bf16.mxu0 0
        %1097 = vmatpush1.bf16.msra.mxu0 0
        %1098 = vmatprep.subr.bf16.mxu0 0
        %1099 = vmatpush1.bf16.msra.mxu0 0
        %1100 = vmatprep.subr.bf16.mxu0 0
        %1101 = vmatpush1.bf16.msra.mxu0 0
        %1102 = vmatprep.subr.bf16.mxu0 0
        %1103 = vmatpush1.bf16.msra.mxu0 0
        %1104 = vmatprep.subr.bf16.mxu0 0
        %1105 = vmatpush1.bf16.msra.mxu0 0
        %1106 = vmatprep.subr.bf16.mxu0 0
        %1107 = vmatpush1.bf16.msra.mxu0 0
        %1108 = vmatprep.subr.bf16.mxu0 0
        %1109 = vmatpush1.bf16.msra.mxu0 0
        %1110 = vmatprep.subr.bf16.mxu0 0
        %1111 = vmatpush1.bf16.msra.mxu0 0
        %1112 = vmatprep.subr.bf16.mxu0 0
        %1113 = vmatpush1.bf16.msra.mxu0 0
        %1114 = vmatprep.subr.bf16.mxu0 0
        %1115 = vmatpush1.bf16.msra.mxu0 0
        %1116 = vmatprep.subr.bf16.mxu0 0
        %1117 = vmatpush1.bf16.msra.mxu0 0
        %1118 = vmatprep.mubr.bf16.mxu0 0
        %1119 = vmatmul.mubr.bf16.gmra.mrb[0].mxu0 %v1084
        %v1120 = vpop.f32.mrb[0].mxu0
        %v1121 = vadd.f32 %v1069, %v1120
        %v1122 = vpop.f32.mrb[0].mxu0
        %v1123 = vpop.f32.mrb[0].mxu0
        %v1124 = vpop.f32.mrb[0].mxu0
        %1125 = vdwg.mxu0
        %v1126 = vmul.f32 %v1121, 0.5
        %v1127 = vmul.f32 %v1121, %v1121
        %v1128 = vmul.f32 %v1127, %v1121
        %v1129 = vmul.f32 %v1128, 0.044715
        %v1130 = vadd.f32 %v1121, %v1129
        %v1131 = vmul.f32 %v1130, 0.7978846
        %v1132 = vtanh.pop %v1131
        %v1133 = vadd.f32 %v1132, 1.0
        %v1134 = vmul.f32 %v1126, %v1133
        %v1135 = vpack.c.bf16 %v1134, %v1134
        %v1136 = vld [vmem:[%s10] sm:$0xf]
        %v1137 = vld [vmem:[%s10 + $0x4] sm:$0xf]
        %v1138 = vld [vmem:[%s10 + $0x8] sm:$0xf]
        %v1139 = vld [vmem:[%s10 + $0xc] sm:$0xf]
        %v1140 = vld [vmem:[%s10 + $0x10] sm:$0xf]
        %v1141 = vld [vmem:[%s10 + $0x14] sm:$0xf]
        %v1142 = vld [vmem:[%s10 + $0x18] sm:$0xf]
        %v1143 = vld [vmem:[%s10 + $0x1c] sm:$0xf]
        %v1144 = vld [vmem:[%s10 + $0x20] sm:$0xf]
        %v1145 = vld [vmem:[%s10 + $0x24] sm:$0xf]
        %v1146 = vld [vmem:[%s10 + $0x28] sm:$0xf]
        %v1147 = vld [vmem:[%s10 + $0x2c] sm:$0xf]
        %v1148 = vld [vmem:[%s10 + $0x30] sm:$0xf]
        %v1149 = vld [vmem:[%s10 + $0x34] sm:$0xf]
        %v1150 = vld [vmem:[%s10 + $0x38] sm:$0xf]
        %v1151 = vld [vmem:[%s10 + $0x3c] sm:$0xf]
        %v1152 = vld [vmem:[%s11] sm:$0x1]
        %v1154 = vlaneseq
        %v1155 = vshrl.u32 %v1154, 7
        %v1156 = vsub.s32 0, %v1155
        %v1157 = vrot.slane %v1152, %v1156
        %v1175 = vunpack.c.l.b16 %v1136
        %v1176 = vunpack.c.l.b16 %v1137
        %v1177 = vunpack.c.l.b16 %v1138
        %v1178 = vunpack.c.l.b16 %v1139
        %v1179 = vunpack.c.l.b16 %v1140
        %v1180 = vunpack.c.l.b16 %v1141
        %v1181 = vunpack.c.l.b16 %v1142
        %v1182 = vunpack.c.l.b16 %v1143
        %v1183 = vunpack.c.l.b16 %v1144
        %v1184 = vunpack.c.l.b16 %v1145
        %v1185 = vunpack.c.l.b16 %v1146
        %v1186 = vunpack.c.l.b16 %v1147
        %v1187 = vunpack.c.l.b16 %v1148
        %v1188 = vunpack.c.l.b16 %v1149
        %v1189 = vunpack.c.l.b16 %v1150
        %v1190 = vunpack.c.l.b16 %v1151
        %v1191 = vpack.c.b16 %v1176, %v1175
        %v1192 = vpack.c.b16 %v1178, %v1177
        %v1193 = vpack.c.b16 %v1180, %v1179
        %v1194 = vpack.c.b16 %v1182, %v1181
        %v1195 = vpack.c.b16 %v1184, %v1183
        %v1196 = vpack.c.b16 %v1186, %v1185
        %v1197 = vpack.c.b16 %v1188, %v1187
        %v1198 = vpack.c.b16 %v1190, %v1189
        %1207 = vmatprep.subr.bf16.mxu0 0
        %1208 = vmatpush1.bf16.msra.mxu0 %v1191
        %1209 = vmatprep.subr.bf16.mxu0 0
        %1210 = vmatpush1.bf16.msra.mxu0 %v1192
        %1211 = vmatprep.subr.bf16.mxu0 0
        %1212 = vmatpush1.bf16.msra.mxu0 %v1193
        %1213 = vmatprep.subr.bf16.mxu0 0
        %1214 = vmatpush1.bf16.msra.mxu0 %v1194
        %1215 = vmatprep.subr.bf16.mxu0 0
        %1216 = vmatpush1.bf16.msra.mxu0 %v1195
        %1217 = vmatprep.subr.bf16.mxu0 0
        %1218 = vmatpush1.bf16.msra.mxu0 %v1196
        %1219 = vmatprep.subr.bf16.mxu0 0
        %1220 = vmatpush1.bf16.msra.mxu0 %v1197
        %1221 = vmatprep.subr.bf16.mxu0 0
        %1222 = vmatpush1.bf16.msra.mxu0 %v1198
        %1223 = vmatprep.subr.bf16.mxu0 0
        %1224 = vmatpush1.bf16.msra.mxu0 0
        %1225 = vmatprep.subr.bf16.mxu0 0
        %1226 = vmatpush1.bf16.msra.mxu0 0
        %1227 = vmatprep.subr.bf16.mxu0 0
        %1228 = vmatpush1.bf16.msra.mxu0 0
        %1229 = vmatprep.subr.bf16.mxu0 0
        %1230 = vmatpush1.bf16.msra.mxu0 0
        %1231 = vmatprep.subr.bf16.mxu0 0
        %1232 = vmatpush1.bf16.msra.mxu0 0
        %1233 = vmatprep.subr.bf16.mxu0 0
        %1234 = vmatpush1.bf16.msra.mxu0 0
        %1235 = vmatprep.subr.bf16.mxu0 0
        %1236 = vmatpush1.bf16.msra.mxu0 0
        %1237 = vmatprep.subr.bf16.mxu0 0
        %1238 = vmatpush1.bf16.msra.mxu0 0
        %1239 = vmatprep.mubr.bf16.mxu0 0
        %1240 = vmatmul.mubr.bf16.gmra.mrb[0].mxu0 %v1135
        %v1241 = vpop.f32.mrb[0].mxu0
        %v1242 = vadd.f32 %v1157, %v1241
        %v1243 = vpop.f32.mrb[0].mxu0
        %v1244 = vpop.f32.mrb[0].mxu0
        %v1245 = vpop.f32.mrb[0].mxu0
        %1246 = vdwg.mxu0
        %v1247 = vadd.f32 %v1029, %v1242
        %1248 = vst.msk [vmem:[%s404] sm:$0xff] %vm413, %v1247
        %s1249 = sand.u32 %s291, 1
        %s1250 = scalar_lea.sflag [#allocation3], %s1249
        %s1251 = sand.u32 %s291, 1
        %s1252 = smul.addr %s1251, 8
        %s1253 = scalar_lea.vmem [#allocation2], %s1252
        // Predicated region
        $region69: #{tpu_custom_call.1} parent=67 // pred_check
          %p1254 = pneg %p301
        $region70: #{tpu_custom_call.1} parent=67 // pred_check_branch
          %1256 = sbr.rel (%p1254) target = $region72
        $region71: #{tpu_custom_call.1} parent=67 // pred_region
          %s1258 = ssub.s32 128, 128
          %1259 = vsyncadd %s1250, %s1258
          %s1260 = smul.addr %s26, 128
          %s1261 = scalar_lea.hbm %s12, %s1260
          %s1263 = sshll.u32 %s1253, 4
          %s1264 = int_to_ptr.vmem [resolvable:$true] %s1263
          %1266 = dma.vmem_to_hbm [thread:$0]  %s1264, 128, %s1261, %s1250
        $region72: #{tpu_custom_call.1} parent=67 // pred_fallthru
          _
      $region68: #{tpu_custom_call.1} parent=5 // pred_fallthru
        _
      %p1267 = scmp.le.s32.totalorder 2, %s21
      // Predicated region
      $region73: #{tpu_custom_call.1} parent=5 // pred_check
        %p1268 = pneg %p1267
      $region74: #{tpu_custom_call.1} parent=5 // pred_check_branch
        %1270 = sbr.rel (%p1268) target = $region76
      $region75: #{tpu_custom_call.1} parent=5 // pred_region
        %s1271 = ssub.s32 %s21, 2
        // Predicated region
        $region77: #{tpu_custom_call.1} parent=75 // pred_check
          %p1272 = pneg %p307
        $region78: #{tpu_custom_call.1} parent=75 // pred_check_branch
          %1274 = sbr.rel (%p1272) target = $region80
        $region79: #{tpu_custom_call.1} parent=75 // pred_region
          %s1275 = sand.u32 %s292, 1
          %s1276 = scalar_lea.sflag [#allocation3], %s1275
          %s1277 = sand.u32 %s292, 1
          %s1278 = smul.addr %s1277, 8
          %s1279 = scalar_lea.vmem [#allocation2], %s1278
          %1280 = dma.done %s1276, 128
        $region80: #{tpu_custom_call.1} parent=75 // pred_fallthru
          _
      $region76: #{tpu_custom_call.1} parent=5 // pred_fallthru
        _
    $region6: #{tpu_custom_call.1} parent=1 // loop_footer
      %s25 = sadd.s32 1, %s21
    $region7: #{tpu_custom_call.1} parent=1 // loop_footer_branch
      %20 = sbr.rel target = $region3
    $region8: #{tpu_custom_call.1} parent=1 // loop_exit
      _
    %1281 = vsyncpa [#allocation3], 1
    %s1282 = scalar_lea.sflag [#allocation3], 1
    %1283 = vsyncpa %s1282, 1

</llo_original>
